<compile_context>
chip_gen: v7x
topology: tpu7x:2x2x1
jax: 0.10.0
libtpu: 0.0.40
codegen_flags: <defaults>
</compile_context>

<pallas_src>
from functools import partial

import jax
import jax.numpy as jnp
from jax.experimental import pallas as pl
from jax.experimental.pallas import tpu as pltpu


def _round_up(x, m):
    return (x + m - 1) // m * m


# ---------------------------------------------------------------------------
# kernels
# ---------------------------------------------------------------------------
def _apply_weight_and_hinge(dist, meta, margin):
    """dist: (TP,1) f32; meta: (TP,2) f32 [weight, is_neg]. Returns (TP,1)."""
    w = meta[:, 0:1]
    flag = meta[:, 1:2]
    hinge = jnp.maximum(margin - dist, 0.0)            # F.relu(margin - d)
    return w * (dist + flag * (hinge - dist))           # (1-flag)*d + flag*hinge


def _finalize_write(out_ref, acc_ref):
    # Lane-dense (1,1,128) output block; wrapper reads [:, 0, 0].
    out_ref[...] = jnp.zeros((1, 1, 128), jnp.float32) + jnp.sum(acc_ref[...])


def _resident_gather_kernel(idx_ref, meta_ref, emb_ref, out_ref, acc_ref, *,
                            tile_pairs, emb_dim, margin, distance_metric):
    """Embedding table resident in VMEM (constant index_map -> single DMA).
    Both pair rows of the tile are gathered with ONE one-hot MXU matmul."""
    i = pl.program_id(1)

    @pl.when(i == 0)
    def _init():
        acc_ref[...] = jnp.zeros_like(acc_ref)

    table = emb_ref[...]                                # (n_pad, cols), storage dtype
    n_pad = table.shape[0]
    idx = idx_ref[...]                                  # (TP, 2) int32

    # Fused gather: stack both index columns along rows -> one (2TP, n_pad)
    # one-hot built from a single iota, one (2TP,n_pad)x(n_pad,cols) matmul.
    idx_both = jnp.concatenate([idx[:, 0:1], idx[:, 1:2]], axis=0)      # (2TP,1)
    node_ids = jax.lax.broadcasted_iota(jnp.int32, (2 * tile_pairs, n_pad), 1)
    onehot = (idx_both == node_ids).astype(table.dtype)                 # exact even in bf16
    g = jnp.dot(onehot, table, preferred_element_type=jnp.float32)      # (2TP, cols) f32

    if distance_metric == "cosine":
        # Table layout: [emb_dim embedding cols | 1 squared-norm col | zero pad]
        e1 = g[:tile_pairs, :emb_dim]
        e2 = g[tile_pairs:, :emb_dim]
        n1sq = g[:tile_pairs, emb_dim:emb_dim + 1]
        n2sq = g[tile_pairs:, emb_dim:emb_dim + 1]
        dot = jnp.sum(e1 * e2, axis=-1, keepdims=True)
        # torch: cos = dot / max(||x1||*||x2||, 1e-8)  ==  dot*rsqrt(max(nsq1*nsq2,1e-16))
        dist = 1.0 - dot * jax.lax.rsqrt(jnp.maximum(n1sq * n2sq, 1e-16))
    else:  # euclidean (squared L2, matching the reference)
        diff = g[:tile_pairs] - g[tile_pairs:]
        dist = jnp.sum(diff * diff, axis=-1, keepdims=True)

    acc_ref[...] += _apply_weight_and_hinge(dist, meta_ref[...], margin)

    @pl.when(i == pl.num_programs(1) - 1)
    def _fin():
        _finalize_write(out_ref, acc_ref)


def _pregathered_kernel(e1_ref, e2_ref, meta_ref, out_ref, acc_ref, *,
                        margin, distance_metric):
    """Fallback (table too large / too many nodes for the MXU gather):
    pre-gathered (TP, D) row tiles streamed through the accumulator grid."""
    i = pl.program_id(1)

    @pl.when(i == 0)
    def _init():
        acc_ref[...] = jnp.zeros_like(acc_ref)

    e1 = e1_ref[...].astype(jnp.float32)
    e2 = e2_ref[...].astype(jnp.float32)
    if distance_metric == "cosine":
        dot = jnp.sum(e1 * e2, axis=-1, keepdims=True)
        n1sq = jnp.sum(e1 * e1, axis=-1, keepdims=True)
        n2sq = jnp.sum(e2 * e2, axis=-1, keepdims=True)
        dist = 1.0 - dot * jax.lax.rsqrt(jnp.maximum(n1sq * n2sq, 1e-16))
    else:
        diff = e1 - e2
        dist = jnp.sum(diff * diff, axis=-1, keepdims=True)

    acc_ref[...] += _apply_weight_and_hinge(dist, meta_ref[...], margin)

    @pl.when(i == pl.num_programs(1) - 1)
    def _fin():
        _finalize_write(out_ref, acc_ref)


# ---------------------------------------------------------------------------
# wrapper helpers
# ---------------------------------------------------------------------------
def _build_resident_table(embeddings, distance_metric):
    """Pad node dim to a multiple of 128 (MXU contraction) and, for cosine,
    append a squared-norm column (so the gather matmul also fetches norms)."""
    n, d = (int(s) for s in embeddings.shape)
    if distance_metric == "cosine":
        nsq = jnp.sum(embeddings.astype(jnp.float32) ** 2, axis=1,
                      keepdims=True).astype(embeddings.dtype)
        cols = _round_up(d + 1, 128)
        table = jnp.concatenate(
            [embeddings, nsq,
             jnp.zeros((n, cols - d - 1), embeddings.dtype)], axis=1)
    else:
        cols = _round_up(d, 128)
        table = embeddings
        if cols > d:
            table = jnp.concatenate(
                [embeddings, jnp.zeros((n, cols - d), embeddings.dtype)], axis=1)
    n_pad = _round_up(n, 128)
    if n_pad > n:
        table = jnp.concatenate(
            [table, jnp.zeros((n_pad - n, table.shape[1]), table.dtype)], axis=0)
    return table


def _vmem_limit_bytes():
    try:
        cap = int(pltpu.get_tpu_info().vmem_capacity_bytes)
    except Exception:
        cap = 64 * 1024 * 1024
    return int(min(0.75 * cap, 100 * 1024 * 1024))


# ---------------------------------------------------------------------------
# public wrapper (mirrors ContrastiveLoss.forward)
# ---------------------------------------------------------------------------
def contrastive_loss(embeddings, positive_pairs, negative_pairs=None, *,
                     margin=1.0, reduction="mean", lambda_contrast=1.0,
                     distance_metric="cosine", max_tile_pairs=None,
                     outer_splits=2, resident_max_nodes=512,
                     max_resident_table_bytes=8 * 1024 * 1024):
    if distance_metric not in ("cosine", "euclidean"):
        raise ValueError(f"Unknown distance metric: {distance_metric}")
    # `reduction` accepted for API fidelity; reference forward() always means.
    del reduction

    num_nodes, emb_dim = (int(s) for s in embeddings.shape)
    num_pos = int(positive_pairs.shape[0])

    # -- fuse pos/neg streams: per-pair weight (= 1/count) and is_neg flag ----
    pair_list = [positive_pairs.astype(jnp.int32)]
    w_list = [jnp.full((num_pos, 1), 1.0 / num_pos, jnp.float32)]
    f_list = [jnp.zeros((num_pos, 1), jnp.float32)]
    if negative_pairs is not None:
        num_neg = int(negative_pairs.shape[0])
        pair_list.append(negative_pairs.astype(jnp.int32))
        w_list.append(jnp.full((num_neg, 1), 1.0 / num_neg, jnp.float32))
        f_list.append(jnp.ones((num_neg, 1), jnp.float32))
    pairs = jnp.concatenate(pair_list, axis=0)
    meta = jnp.concatenate(
        [jnp.concatenate(w_list, axis=0), jnp.concatenate(f_list, axis=0)], axis=1)
    total = int(pairs.shape[0])

    # -- resident-vs-streamed heuristic: one-hot gather is ~4*N*D flops/pair
    #    vs ~2*D*itemsize HBM bytes/pair streamed; cap N conservatively. ------
    table_bytes = num_nodes * emb_dim * embeddings.dtype.itemsize
    resident = (num_nodes <= int(resident_max_nodes)
                and table_bytes <= int(max_resident_table_bytes))

    # -- tiling: pair axis -> (outer parallel, inner arbitrary) grid ----------
    if max_tile_pairs is None:
        max_tile_pairs = 256 if resident else 1024
    tile_pairs = max(8, _round_up(min(int(max_tile_pairs),
                                      _round_up(total, 8)), 8))
    num_tiles = -(-total // tile_pairs)
    num_outer = max(1, min(int(outer_splits), num_tiles))
    num_inner = -(-num_tiles // num_outer)
    total_padded = num_outer * num_inner * tile_pairs
    pad = total_padded - total
    pairs_p = jnp.pad(pairs, ((0, pad), (0, 0)))     # padded idx -> row 0
    meta_p = jnp.pad(meta, ((0, pad), (0, 0)))       # padded weight -> 0.0

    out_shape = jax.ShapeDtypeStruct((num_outer, 1, 128), jnp.float32)
    out_spec = pl.BlockSpec((1, 1, 128), lambda o, i: (o, 0, 0))
    scratch = [pltpu.VMEM((tile_pairs, 1), jnp.float32)]
    compiler_params = pltpu.CompilerParams(
        dimension_semantics=("parallel", "arbitrary"),   # 2 TCs on v7x
        vmem_limit_bytes=_vmem_limit_bytes())
    transcend = total_padded if distance_metric == "cosine" else 0
    pair_spec = pl.BlockSpec((tile_pairs, 2), lambda o, i: (o * num_inner + i, 0))

    if resident:
        table = _build_resident_table(embeddings, distance_metric)
        n_pad, cols = (int(s) for s in table.shape)
        kernel = partial(_resident_gather_kernel, tile_pairs=tile_pairs,
                         emb_dim=emb_dim, margin=float(margin),
                         distance_metric=distance_metric)
        cost = pl.CostEstimate(
            flops=int(2 * (2 * total_padded) * n_pad * cols
                      + 8 * total_padded * emb_dim),
            transcendentals=int(transcend),
            bytes_accessed=int(table.size * table.dtype.itemsize
                               + pairs_p.size * 4 + meta_p.size * 4
                               + num_outer * 128 * 4))
        # TODO(synk): on 64 MiB-VMEM v7x with large resident tables, request
        # pipeline_mode=pl.Buffered(1) for the constant-index table block.
        partials = pl.pallas_call(
            kernel,
            out_shape=out_shape,
            grid_spec=pltpu.PrefetchScalarGridSpec(
                num_scalar_prefetch=0,
                grid=(num_outer, num_inner),
                in_specs=[
                    pair_spec,                                         # idx tiles
                    pl.BlockSpec((tile_pairs, 2),
                                 lambda o, i: (o * num_inner + i, 0)),  # meta tiles
                    pl.BlockSpec((n_pad, cols), lambda o, i: (0, 0)),   # resident table
                ],
                out_specs=out_spec,
                scratch_shapes=scratch),
            compiler_params=compiler_params,
            cost_estimate=cost,
        )(pairs_p, meta_p, table)
    else:
        # TODO(synk): replace the JAX pre-gather with an in-kernel manual DMA
        # row gather (memory_space=pl.ANY + scalar-prefetched indices) to cut
        # the ~3x HBM traffic of materializing e1/e2.
        e1 = embeddings[pairs_p[:, 0]]
        e2 = embeddings[pairs_p[:, 1]]
        kernel = partial(_pregathered_kernel, margin=float(margin),
                         distance_metric=distance_metric)
        cost = pl.CostEstimate(
            flops=int(8 * total_padded * emb_dim),
            transcendentals=int(transcend),
            bytes_accessed=int(2 * total_padded * emb_dim
                               * embeddings.dtype.itemsize
                               + meta_p.size * 4 + num_outer * 128 * 4))
        partials = pl.pallas_call(
            kernel,
            out_shape=out_shape,
            grid_spec=pltpu.PrefetchScalarGridSpec(
                num_scalar_prefetch=0,
                grid=(num_outer, num_inner),
                in_specs=[
                    pl.BlockSpec((tile_pairs, emb_dim),
                                 lambda o, i: (o * num_inner + i, 0)),
                    pl.BlockSpec((tile_pairs, emb_dim),
                                 lambda o, i: (o * num_inner + i, 0)),
                    pl.BlockSpec((tile_pairs, 2),
                                 lambda o, i: (o * num_inner + i, 0)),
                ],
                out_specs=out_spec,
                scratch_shapes=scratch),
            compiler_params=compiler_params,
            cost_estimate=cost,
        )(e1, e2, meta_p)

    return lambda_contrast * jnp.sum(partials[:, 0, 0])


# ---------------------------------------------------------------------------
# pure-JAX reference for correctness checking
# ---------------------------------------------------------------------------
def _reference_loss(embeddings, positive_pairs, negative_pairs=None, *,
                    margin=1.0, lambda_contrast=1.0, distance_metric="cosine"):
    def dist(x1, x2):
        if distance_metric == "cosine":
            dot = jnp.sum(x1 * x2, axis=1)
            n1 = jnp.sqrt(jnp.sum(x1 * x1, axis=1))
            n2 = jnp.sqrt(jnp.sum(x2 * x2, axis=1))
            return 1.0 - dot / jnp.maximum(n1 * n2, 1e-8)
        d = x1 - x2
        return jnp.sum(d * d, axis=1)

    p1 = embeddings[positive_pairs[:, 0]]
    p2 = embeddings[positive_pairs[:, 1]]
    loss = jnp.mean(dist(p1, p2))
    if negative_pairs is not None:
        n1 = embeddings[negative_pairs[:, 0]]
        n2 = embeddings[negative_pairs[:, 1]]
        loss = loss + jnp.mean(jnp.maximum(margin - dist(n1, n2), 0.0))
    return lambda_contrast * loss


if __name__ == "__main__":
    key = jax.random.PRNGKey(0)
    k_emb, k_pos, k_neg = jax.random.split(key, 3)

    num_nodes, emb_dim = 64, 128
    num_pos, num_neg = 96, 80   # unequal counts; exercises per-pair weighting

    embeddings = jax.random.normal(k_emb, (num_nodes, emb_dim), dtype=jnp.float32)
    positive_pairs = jax.random.randint(k_pos, (num_pos, 2), 0, num_nodes,
                                        dtype=jnp.int32)
    negative_pairs = jax.random.randint(k_neg, (num_neg, 2), 0, num_nodes,
                                        dtype=jnp.int32)

    checks = []

    # 1) cosine, fused pos+neg, VMEM-resident fused one-hot gather path.
    got = contrastive_loss(embeddings, positive_pairs, negative_pairs,
                           margin=1.0, lambda_contrast=1.0,
                           distance_metric="cosine")
    ref = _reference_loss(embeddings, positive_pairs, negative_pairs,
                          margin=1.0, lambda_contrast=1.0,
                          distance_metric="cosine")
    checks.append(("cosine", got, ref))

    # 2) euclidean (squared L2, as in the spec), different margin / lambda.
    got = contrastive_loss(embeddings, positive_pairs, negative_pairs,
                           margin=2.0, lambda_contrast=0.5,
                           distance_metric="euclidean")
    ref = _reference_loss(embeddings, positive_pairs, negative_pairs,
                          margin=2.0, lambda_contrast=0.5,
                          distance_metric="euclidean")
    checks.append(("euclidean", got, ref))

    # 3) positive pairs only.
    got = contrastive_loss(embeddings, positive_pairs, None)
    ref = _reference_loss(embeddings, positive_pairs, None)
    checks.append(("pos_only", got, ref))

    # 4) multi-tile + 2-way parallel outer split on the resident path.
    got = contrastive_loss(embeddings, positive_pairs, negative_pairs,
                           distance_metric="cosine", max_tile_pairs=32)
    ref = checks[0][2]
    checks.append(("multi_tile_resident", got, ref))

    # 5) forced fallback (pre-gathered) path + multi-tile + parallel split.
    got = contrastive_loss(embeddings, positive_pairs, negative_pairs,
                           distance_metric="cosine", max_tile_pairs=32,
                           resident_max_nodes=0)
    checks.append(("multi_tile_pregathered", got, ref))

    for name, got, want in checks:
        got = jax.block_until_ready(got)
        assert jnp.allclose(got, want, rtol=1e-4, atol=1e-5), (name, got, want)

    print("KERNEL_OK")
</pallas_src>

<mosaic_0001>
module attributes {stable_mosaic.version = 11 : i64} {
  func.func @_resident_gather_kernel(%arg0: i32, %arg1: i32, %arg2: memref<176x2xi32, #tpu.memory_space<vmem>>, %arg3: memref<176x2xf32, #tpu.memory_space<vmem>>, %arg4: memref<128x256xf32, #tpu.memory_space<vmem>>, %arg5: memref<1x1x128xf32, #tpu.memory_space<vmem>>, %arg6: memref<176x1xf32, #tpu.memory_space<vmem>>) attributes {dimension_semantics = [#tpu.dimension_semantics<parallel>, #tpu.dimension_semantics<arbitrary>], iteration_bounds = array<i64: 1, 1>, scalar_prefetch = 0 : i64, scratch_operands = 1 : i64, tpu.core_type = #tpu.core_type<tc>, window_params = [{transform_indices = @transform_0, window_bounds = array<i64: 176, 2>}, {transform_indices = @transform_1, window_bounds = array<i64: 176, 2>}, {pipeline_mode = #tpu.pipeline_mode<synchronous>, transform_indices = @transform_2, window_bounds = array<i64: 128, 256>}, {transform_indices = @transform_3, window_bounds = array<i64: 1, 1, 128>}]} {
    %c0_i32 = arith.constant 0 : i32
    %0 = arith.cmpi eq, %arg1, %c0_i32 : i32
    %1 = arith.extui %0 : i1 to i32
    %c0_i32_0 = arith.constant 0 : i32
    %2 = arith.cmpi ne, %1, %c0_i32_0 : i32
    scf.if %2 {
      %cst_17 = arith.constant 0.000000e+00 : f32
      %45 = vector.broadcast %cst_17 : f32 to vector<176x1xf32>
      %c0_18 = arith.constant 0 : index
      %c0_19 = arith.constant 0 : index
      %46 = vector.load %arg6[%c0_18, %c0_19] : memref<176x1xf32, #tpu.memory_space<vmem>>, vector<176x1xf32>
      tpu.vector_store %arg6[%c0_18, %c0_19], %45 {strides = array<i32>} : memref<176x1xf32, #tpu.memory_space<vmem>>, vector<176x1xf32>,
    } else {
    }
    %c0 = arith.constant 0 : index
    %c0_1 = arith.constant 0 : index
    %3 = vector.load %arg4[%c0, %c0_1] : memref<128x256xf32, #tpu.memory_space<vmem>>, vector<128x256xf32>
    %c0_2 = arith.constant 0 : index
    %c0_3 = arith.constant 0 : index
    %4 = vector.load %arg2[%c0_2, %c0_3] : memref<176x2xi32, #tpu.memory_space<vmem>>, vector<176x2xi32>
    %5 = vector.extract_strided_slice %4 {offsets = [0, 0], sizes = [176, 1], strides = [1, 1]} : vector<176x2xi32> to vector<176x1xi32>
    %6 = vector.extract_strided_slice %4 {offsets = [0, 1], sizes = [176, 1], strides = [1, 1]} : vector<176x2xi32> to vector<176x1xi32>
    %7 = tpu.concatenate %5, %6 in 0 : vector<176x1xi32>, vector<176x1xi32> -> vector<352x1xi32>
    %8 = tpu.iota {dimensions = array<i32: 1>} : vector<352x128xi32>
    %9 = vector.broadcast %7 : vector<352x1xi32> to vector<352x128xi32>
    %10 = arith.cmpi eq, %9, %8 : vector<352x128xi32>
    %11 = arith.extui %10 : vector<352x128xi1> to vector<352x128xi32>
    %12 = arith.sitofp %11 : vector<352x128xi32> to vector<352x128xf32>
    %cst = arith.constant dense<0.000000e+00> : vector<352x256xf32>
    %13 = tpu.matmul %12, %3, %cst {dimension_numbers = #tpu.dot_dimension_numbers<[1], [0], [0], [1], [0, 0, 1, 1], [], []>} : vector<352x128xf32>, vector<128x256xf32>, vector<352x256xf32> -> vector<352x256xf32>
    %14 = vector.extract_strided_slice %13 {offsets = [0, 0], sizes = [176, 128], strides = [1, 1]} : vector<352x256xf32> to vector<176x128xf32>
    %15 = vector.extract_strided_slice %13 {offsets = [176, 0], sizes = [176, 128], strides = [1, 1]} : vector<352x256xf32> to vector<176x128xf32>
    %16 = vector.extract_strided_slice %13 {offsets = [0, 128], sizes = [176, 1], strides = [1, 1]} : vector<352x256xf32> to vector<176x1xf32>
    %17 = vector.extract_strided_slice %13 {offsets = [176, 128], sizes = [176, 1], strides = [1, 1]} : vector<352x256xf32> to vector<176x1xf32>
    %18 = arith.mulf %14, %15 : vector<176x128xf32>
    %cst_4 = arith.constant dense<0.000000e+00> : vector<176xf32>
    %19 = vector.multi_reduction <add>, %18, %cst_4 [1] : vector<176x128xf32> to vector<176xf32>
    %20 = vector.shape_cast %19 : vector<176xf32> to vector<176x1xf32>
    %21 = arith.mulf %16, %17 : vector<176x1xf32>
    %cst_5 = arith.constant 1.000000e-16 : f32
    %22 = vector.broadcast %cst_5 : f32 to vector<176x1xf32>
    %23 = arith.maximumf %21, %22 : vector<176x1xf32>
    %24 = math.rsqrt %23 : vector<176x1xf32>
    %25 = arith.mulf %20, %24 : vector<176x1xf32>
    %cst_6 = arith.constant 1.000000e+00 : f32
    %26 = vector.broadcast %cst_6 : f32 to vector<176x1xf32>
    %27 = arith.subf %26, %25 : vector<176x1xf32>
    %c0_7 = arith.constant 0 : index
    %c0_8 = arith.constant 0 : index
    %28 = vector.load %arg6[%c0_7, %c0_8] : memref<176x1xf32, #tpu.memory_space<vmem>>, vector<176x1xf32>
    %c0_9 = arith.constant 0 : index
    %c0_10 = arith.constant 0 : index
    %29 = vector.load %arg3[%c0_9, %c0_10] : memref<176x2xf32, #tpu.memory_space<vmem>>, vector<176x2xf32>
    %30 = vector.extract_strided_slice %29 {offsets = [0, 0], sizes = [176, 1], strides = [1, 1]} : vector<176x2xf32> to vector<176x1xf32>
    %31 = vector.extract_strided_slice %29 {offsets = [0, 1], sizes = [176, 1], strides = [1, 1]} : vector<176x2xf32> to vector<176x1xf32>
    %cst_11 = arith.constant 1.000000e+00 : f32
    %32 = vector.broadcast %cst_11 : f32 to vector<176x1xf32>
    %33 = arith.subf %32, %27 : vector<176x1xf32>
    %cst_12 = arith.constant 0.000000e+00 : f32
    %34 = vector.broadcast %cst_12 : f32 to vector<176x1xf32>
    %35 = arith.maximumf %33, %34 : vector<176x1xf32>
    %36 = arith.subf %35, %27 : vector<176x1xf32>
    %37 = arith.mulf %31, %36 : vector<176x1xf32>
    %38 = arith.addf %27, %37 : vector<176x1xf32>
    %39 = arith.mulf %30, %38 : vector<176x1xf32>
    %40 = arith.addf %28, %39 : vector<176x1xf32>
    %c0_13 = arith.constant 0 : index
    %c0_14 = arith.constant 0 : index
    %41 = vector.load %arg6[%c0_13, %c0_14] : memref<176x1xf32, #tpu.memory_space<vmem>>, vector<176x1xf32>
    tpu.vector_store %arg6[%c0_13, %c0_14], %40 {strides = array<i32>} : memref<176x1xf32, #tpu.memory_space<vmem>>, vector<176x1xf32>,
    %c0_i32_15 = arith.constant 0 : i32
    %42 = arith.cmpi eq, %arg1, %c0_i32_15 : i32
    %43 = arith.extui %42 : i1 to i32
    %c0_i32_16 = arith.constant 0 : i32
    %44 = arith.cmpi ne, %43, %c0_i32_16 : i32
    scf.if %44 {
      %cst_17 = arith.constant 0.000000e+00 : f32
      %45 = vector.broadcast %cst_17 : f32 to vector<1x1x128xf32>
      %c0_18 = arith.constant 0 : index
      %c0_19 = arith.constant 0 : index
      %46 = vector.load %arg6[%c0_18, %c0_19] : memref<176x1xf32, #tpu.memory_space<vmem>>, vector<176x1xf32>
      %47 = vector.shape_cast %46 : vector<176x1xf32> to vector<1x176x1xf32>
      %cst_20 = arith.constant dense<0.000000e+00> : vector<1xf32>
      %48 = vector.multi_reduction <add>, %47, %cst_20 [1, 2] : vector<1x176x1xf32> to vector<1xf32>
      %49 = vector.shape_cast %48 : vector<1xf32> to vector<1x1x1xf32>
      %50 = vector.extract %49[0, 0, 0] : f32 from vector<1x1x1xf32>
      %51 = vector.broadcast %50 : f32 to vector<1x1x128xf32>
      %52 = arith.addf %45, %51 : vector<1x1x128xf32>
      %c0_21 = arith.constant 0 : index
      %c0_22 = arith.constant 0 : index
      %c0_23 = arith.constant 0 : index
      %53 = vector.load %arg5[%c0_21, %c0_22, %c0_23] : memref<1x1x128xf32, #tpu.memory_space<vmem>>, vector<1x1x128xf32>
      tpu.vector_store %arg5[%c0_21, %c0_22, %c0_23], %52 {strides = array<i32>} : memref<1x1x128xf32, #tpu.memory_space<vmem>>, vector<1x1x128xf32>,
    } else {
    }
    return
  }
  func.func @transform_0(%arg0: i32, %arg1: i32) -> (i32, i32) {
    %c1_i32 = arith.constant 1 : i32
    %0 = arith.muli %arg0, %c1_i32 : i32
    %1 = arith.addi %0, %arg1 : i32
    %c0_i32 = arith.constant 0 : i32
    %c0_i32_0 = arith.constant 0 : i32
    return %1, %c0_i32 : i32, i32
  }
  func.func @transform_1(%arg0: i32, %arg1: i32) -> (i32, i32) {
    %c1_i32 = arith.constant 1 : i32
    %0 = arith.muli %arg0, %c1_i32 : i32
    %1 = arith.addi %0, %arg1 : i32
    %c0_i32 = arith.constant 0 : i32
    %c0_i32_0 = arith.constant 0 : i32
    return %1, %c0_i32 : i32, i32
  }
  func.func @transform_2(%arg0: i32, %arg1: i32) -> (i32, i32) {
    %c0_i32 = arith.constant 0 : i32
    %c0_i32_0 = arith.constant 0 : i32
    %c0_i32_1 = arith.constant 0 : i32
    return %c0_i32, %c0_i32_0 : i32, i32
  }
  func.func @transform_3(%arg0: i32, %arg1: i32) -> (i32, i32, i32) {
    %c0_i32 = arith.constant 0 : i32
    %c0_i32_0 = arith.constant 0 : i32
    %c0_i32_1 = arith.constant 0 : i32
    return %arg0, %c0_i32, %c0_i32_0 : i32, i32, i32
  }
}

</mosaic_0001>

<llo_original>
// kernel: tpu_custom_call.1
$region0: #{tpu_custom_call.1}
  #allocation0 [shape = 'u32[]', space=smem, size = 0x4, offset = 0x4, fixed_abs, tag = 'smem constant byte address 0x4 - core index']
  #allocation1 [shape = 'u32[144,128]{1,0:T(1,128)}', space=vmem, size = 0x12000, scoped, tag = 'internal scratch']
  #allocation2 [shape = 'f32[176,1]{1,0:T(8,128)}', space=vmem, size = 0x16000, scoped, tag = 'scratch operand']
  %s0 = inlined_call_operand.vmem [shape: s32[176,2], index: 0, kind: input, shape index: {}]
  %s1 = inlined_call_operand.vmem [shape: f32[176,2], index: 1, kind: input, shape index: {}]
  %s2 = inlined_call_operand.vmem [shape: f32[128,256], index: 2, kind: input, shape index: {}]
  %s3 = inlined_call_operand.hbm [shape: f32[1,1,128], index: 3, kind: output, shape index: {}]
  %s4 = sld [smem:[#allocation0]]
  $region30: #{tpu_custom_call.1} parent=0
    _
  %s6 = ssub.s32 1, %s4
  %s7 = scalar_select 0, %s6, %s4
  $region1: #{tpu_custom_call.1} parent=0
    #allocation3 [shape = 'u8[512]{0}', space=vmem, size = 0x400, scoped, tag = 'output window, operand 0, single buffered']
    #allocation4 [shape = 's32[1]{0}', space=sflag, size = 0x4, scoped, tag = 'scoped memory for tpu_custom_call.1']
    %8 = vsyncpa [#allocation4], 0
    // Predicated region
    $region2: #{tpu_custom_call.1} parent=1 // pred_check
      _
    $region3: #{tpu_custom_call.1} parent=1 // pred_check_branch
      %10 = sbr.rel (0) target = $region5
    $region4: #{tpu_custom_call.1} parent=1 // pred_region
      %s11 = sadd.s32 0, 0
      %s12 = smul.u32 22, %s11
      %p13 = scmp.lt.s32.totalorder %s12, 21
      %s14 = scalar_select %p13, %s12, 21
      %s15 = smul.addr %s14, 8
      %s16 = scalar_lea.vmem %s0, %s15
      %s17 = sadd.s32 0, 0
      %s18 = smul.u32 22, %s17
    $region5: #{tpu_custom_call.1} parent=1 // pred_fallthru
      _
    // Predicated region
    $region6: #{tpu_custom_call.1} parent=1 // pred_check
      _
    $region7: #{tpu_custom_call.1} parent=1 // pred_check_branch
      %20 = sbr.rel (0) target = $region9
    $region8: #{tpu_custom_call.1} parent=1 // pred_region
      %s21 = sadd.s32 0, 0
      %s22 = smul.u32 22, %s21
      %p23 = scmp.lt.s32.totalorder %s22, 21
      %s24 = scalar_select %p23, %s22, 21
      %s25 = smul.addr %s24, 8
      %s26 = scalar_lea.vmem %s1, %s25
      %s27 = sadd.s32 0, 0
      %s28 = smul.u32 22, %s27
    $region9: #{tpu_custom_call.1} parent=1 // pred_fallthru
      _
    // Predicated region
    $region10: #{tpu_custom_call.1} parent=1 // pred_check
      _
    $region11: #{tpu_custom_call.1} parent=1 // pred_check_branch
      %30 = sbr.rel (0) target = $region13
    $region12: #{tpu_custom_call.1} parent=1 // pred_region
      _
    $region13: #{tpu_custom_call.1} parent=1 // pred_fallthru
      _
    %s31 = sadd.s32 0, 0
    %s32 = smul.u32 22, %s31
    %p33 = scmp.lt.s32.totalorder %s32, 21
    %s34 = scalar_select %p33, %s32, 21
    %s35 = smul.addr %s34, 8
    %s36 = scalar_lea.vmem %s0, %s35
    %s37 = sadd.s32 0, 0
    %s38 = smul.u32 22, %s37
    %p39 = scmp.lt.s32.totalorder %s38, 21
    %s40 = scalar_select %p39, %s38, 21
    %s41 = smul.addr %s40, 8
    %s42 = scalar_lea.vmem %s1, %s41
    %s43 = sadd.s32 0, 0
    %s44 = smul.u32 22, %s43
    %p45 = scmp.lt.s32.totalorder %s44, 21
    %s46 = scalar_select %p45, %s44, 21
    %s47 = smul.addr %s46, 8
    %s48 = scalar_lea.vmem %s0, %s47
    %s49 = sadd.s32 0, 0
    %s50 = smul.u32 22, %s49
    %s51 = sadd.s32 0, 0
    %s52 = smul.u32 22, %s51
    %p53 = scmp.lt.s32.totalorder %s52, 21
    %s54 = scalar_select %p53, %s52, 21
    %s55 = smul.addr %s54, 8
    %s56 = scalar_lea.vmem %s1, %s55
    %s57 = sadd.s32 0, 0
    %s58 = smul.u32 22, %s57
    %p59 = scmp.eq.s32.totalorder 0, 0
    // Predicated region
    $region14: #{tpu_custom_call.1} parent=1 // pred_check
      %p60 = pneg %p59
    $region15: #{tpu_custom_call.1} parent=1 // pred_check_branch
      %62 = sbr.rel (%p60) target = $region17
    $region16: #{tpu_custom_call.1} parent=1 // pred_region
      %vm63 = vcmask 7168
      %64 = vst.msk [vmem:[#allocation2] sm:$0xff] %vm63, 0.0
      %65 = vst.msk [vmem:[#allocation2 + $0x8] sm:$0xff] %vm63, 0.0
      %66 = vst.msk [vmem:[#allocation2 + $0x10] sm:$0xff] %vm63, 0.0
      %67 = vst.msk [vmem:[#allocation2 + $0x18] sm:$0xff] %vm63, 0.0
      %68 = vst.msk [vmem:[#allocation2 + $0x20] sm:$0xff] %vm63, 0.0
      %69 = vst.msk [vmem:[#allocation2 + $0x28] sm:$0xff] %vm63, 0.0
      %70 = vst.msk [vmem:[#allocation2 + $0x30] sm:$0xff] %vm63, 0.0
      %71 = vst.msk [vmem:[#allocation2 + $0x38] sm:$0xff] %vm63, 0.0
      %72 = vst.msk [vmem:[#allocation2 + $0x40] sm:$0xff] %vm63, 0.0
      %73 = vst.msk [vmem:[#allocation2 + $0x48] sm:$0xff] %vm63, 0.0
      %74 = vst.msk [vmem:[#allocation2 + $0x50] sm:$0xff] %vm63, 0.0
      %75 = vst.msk [vmem:[#allocation2 + $0x58] sm:$0xff] %vm63, 0.0
      %76 = vst.msk [vmem:[#allocation2 + $0x60] sm:$0xff] %vm63, 0.0
      %77 = vst.msk [vmem:[#allocation2 + $0x68] sm:$0xff] %vm63, 0.0
      %78 = vst.msk [vmem:[#allocation2 + $0x70] sm:$0xff] %vm63, 0.0
      %79 = vst.msk [vmem:[#allocation2 + $0x78] sm:$0xff] %vm63, 0.0
      %80 = vst.msk [vmem:[#allocation2 + $0x80] sm:$0xff] %vm63, 0.0
      %81 = vst.msk [vmem:[#allocation2 + $0x88] sm:$0xff] %vm63, 0.0
      %82 = vst.msk [vmem:[#allocation2 + $0x90] sm:$0xff] %vm63, 0.0
      %83 = vst.msk [vmem:[#allocation2 + $0x98] sm:$0xff] %vm63, 0.0
      %84 = vst.msk [vmem:[#allocation2 + $0xa0] sm:$0xff] %vm63, 0.0
      %85 = vst.msk [vmem:[#allocation2 + $0xa8] sm:$0xff] %vm63, 0.0
    $region17: #{tpu_custom_call.1} parent=1 // pred_fallthru
      _
    %v86 = vld [vmem:[%s2] sm:$0xff]
    %v87 = vld [vmem:[%s2 + $0x8] sm:$0xff]
    %v88 = vld [vmem:[%s2 + $0x10] sm:$0xff]
    %v89 = vld [vmem:[%s2 + $0x18] sm:$0xff]
    %v90 = vld [vmem:[%s2 + $0x20] sm:$0xff]
    %v91 = vld [vmem:[%s2 + $0x28] sm:$0xff]
    %v92 = vld [vmem:[%s2 + $0x30] sm:$0xff]
    %v93 = vld [vmem:[%s2 + $0x38] sm:$0xff]
    %v94 = vld [vmem:[%s2 + $0x40] sm:$0xff]
    %v95 = vld [vmem:[%s2 + $0x48] sm:$0xff]
    %v96 = vld [vmem:[%s2 + $0x50] sm:$0xff]
    %v97 = vld [vmem:[%s2 + $0x58] sm:$0xff]
    %v98 = vld [vmem:[%s2 + $0x60] sm:$0xff]
    %v99 = vld [vmem:[%s2 + $0x68] sm:$0xff]
    %v100 = vld [vmem:[%s2 + $0x70] sm:$0xff]
    %v101 = vld [vmem:[%s2 + $0x78] sm:$0xff]
    %v102 = vld [vmem:[%s2 + $0x80] sm:$0xff]
    %v103 = vld [vmem:[%s2 + $0x88] sm:$0xff]
    %v104 = vld [vmem:[%s2 + $0x90] sm:$0xff]
    %v105 = vld [vmem:[%s2 + $0x98] sm:$0xff]
    %v106 = vld [vmem:[%s2 + $0xa0] sm:$0xff]
    %v107 = vld [vmem:[%s2 + $0xa8] sm:$0xff]
    %v108 = vld [vmem:[%s2 + $0xb0] sm:$0xff]
    %v109 = vld [vmem:[%s2 + $0xb8] sm:$0xff]
    %v110 = vld [vmem:[%s2 + $0xc0] sm:$0xff]
    %v111 = vld [vmem:[%s2 + $0xc8] sm:$0xff]
    %v112 = vld [vmem:[%s2 + $0xd0] sm:$0xff]
    %v113 = vld [vmem:[%s2 + $0xd8] sm:$0xff]
    %v114 = vld [vmem:[%s2 + $0xe0] sm:$0xff]
    %v115 = vld [vmem:[%s2 + $0xe8] sm:$0xff]
    %v116 = vld [vmem:[%s2 + $0xf0] sm:$0xff]
    %v117 = vld [vmem:[%s2 + $0xf8] sm:$0xff]
    %v118 = vld [vmem:[%s48] sm:$0xff]
    %v119 = vld [vmem:[%s48 + $0x8] sm:$0xff]
    %v120 = vld [vmem:[%s48 + $0x10] sm:$0xff]
    %v121 = vld [vmem:[%s48 + $0x18] sm:$0xff]
    %v122 = vld [vmem:[%s48 + $0x20] sm:$0xff]
    %v123 = vld [vmem:[%s48 + $0x28] sm:$0xff]
    %v124 = vld [vmem:[%s48 + $0x30] sm:$0xff]
    %v125 = vld [vmem:[%s48 + $0x38] sm:$0xff]
    %v126 = vld [vmem:[%s48 + $0x40] sm:$0xff]
    %v127 = vld [vmem:[%s48 + $0x48] sm:$0xff]
    %v128 = vld [vmem:[%s48 + $0x50] sm:$0xff]
    %v129 = vld [vmem:[%s48 + $0x58] sm:$0xff]
    %v130 = vld [vmem:[%s48 + $0x60] sm:$0xff]
    %v131 = vld [vmem:[%s48 + $0x68] sm:$0xff]
    %v132 = vld [vmem:[%s48 + $0x70] sm:$0xff]
    %v133 = vld [vmem:[%s48 + $0x78] sm:$0xff]
    %v134 = vld [vmem:[%s48 + $0x80] sm:$0xff]
    %v135 = vld [vmem:[%s48 + $0x88] sm:$0xff]
    %v136 = vld [vmem:[%s48 + $0x90] sm:$0xff]
    %v137 = vld [vmem:[%s48 + $0x98] sm:$0xff]
    %v138 = vld [vmem:[%s48 + $0xa0] sm:$0xff]
    %v139 = vld [vmem:[%s48 + $0xa8] sm:$0xff]
    %140 = vrot.lane.b32.xlu0 %v118, 127
    %v141 = vpop.permute.xlu0 %140
    %142 = vrot.lane.b32.xlu0 %v119, 127
    %v143 = vpop.permute.xlu0 %142
    %144 = vrot.lane.b32.xlu0 %v120, 127
    %v145 = vpop.permute.xlu0 %144
    %146 = vrot.lane.b32.xlu0 %v121, 127
    %v147 = vpop.permute.xlu0 %146
    %148 = vrot.lane.b32.xlu0 %v122, 127
    %v149 = vpop.permute.xlu0 %148
    %150 = vrot.lane.b32.xlu0 %v123, 127
    %v151 = vpop.permute.xlu0 %150
    %152 = vrot.lane.b32.xlu0 %v124, 127
    %v153 = vpop.permute.xlu0 %152
    %154 = vrot.lane.b32.xlu0 %v125, 127
    %v155 = vpop.permute.xlu0 %154
    %156 = vrot.lane.b32.xlu0 %v126, 127
    %v157 = vpop.permute.xlu0 %156
    %158 = vrot.lane.b32.xlu0 %v127, 127
    %v159 = vpop.permute.xlu0 %158
    %160 = vrot.lane.b32.xlu0 %v128, 127
    %v161 = vpop.permute.xlu0 %160
    %162 = vrot.lane.b32.xlu0 %v129, 127
    %v163 = vpop.permute.xlu0 %162
    %164 = vrot.lane.b32.xlu0 %v130, 127
    %v165 = vpop.permute.xlu0 %164
    %166 = vrot.lane.b32.xlu0 %v131, 127
    %v167 = vpop.permute.xlu0 %166
    %168 = vrot.lane.b32.xlu0 %v132, 127
    %v169 = vpop.permute.xlu0 %168
    %170 = vrot.lane.b32.xlu0 %v133, 127
    %v171 = vpop.permute.xlu0 %170
    %172 = vrot.lane.b32.xlu0 %v134, 127
    %v173 = vpop.permute.xlu0 %172
    %174 = vrot.lane.b32.xlu0 %v135, 127
    %v175 = vpop.permute.xlu0 %174
    %176 = vrot.lane.b32.xlu0 %v136, 127
    %v177 = vpop.permute.xlu0 %176
    %178 = vrot.lane.b32.xlu0 %v137, 127
    %v179 = vpop.permute.xlu0 %178
    %180 = vrot.lane.b32.xlu0 %v138, 127
    %v181 = vpop.permute.xlu0 %180
    %182 = vrot.lane.b32.xlu0 %v139, 127
    %v183 = vpop.permute.xlu0 %182
    %v184 = vlaneseq
    %v185 = vand.u32 %v184, 127
    %186 = vset.pattern.permute.xlu0 0
    %187 = vperm.xlu0 %186, %v118
    %v188 = vpop.permute.xlu0 %187
    %189 = vset.pattern.permute.xlu0 0
    %190 = vperm.xlu0 %189, %v119
    %v191 = vpop.permute.xlu0 %190
    %192 = vset.pattern.permute.xlu0 0
    %193 = vperm.xlu0 %192, %v120
    %v194 = vpop.permute.xlu0 %193
    %195 = vset.pattern.permute.xlu0 0
    %196 = vperm.xlu0 %195, %v121
    %v197 = vpop.permute.xlu0 %196
    %198 = vset.pattern.permute.xlu0 0
    %199 = vperm.xlu0 %198, %v122
    %v200 = vpop.permute.xlu0 %199
    %201 = vset.pattern.permute.xlu0 0
    %202 = vperm.xlu0 %201, %v123
    %v203 = vpop.permute.xlu0 %202
    %204 = vset.pattern.permute.xlu0 0
    %205 = vperm.xlu0 %204, %v124
    %v206 = vpop.permute.xlu0 %205
    %207 = vset.pattern.permute.xlu0 0
    %208 = vperm.xlu0 %207, %v125
    %v209 = vpop.permute.xlu0 %208
    %210 = vset.pattern.permute.xlu0 0
    %211 = vperm.xlu0 %210, %v126
    %v212 = vpop.permute.xlu0 %211
    %213 = vset.pattern.permute.xlu0 0
    %214 = vperm.xlu0 %213, %v127
    %v215 = vpop.permute.xlu0 %214
    %216 = vset.pattern.permute.xlu0 0
    %217 = vperm.xlu0 %216, %v128
    %v218 = vpop.permute.xlu0 %217
    %219 = vset.pattern.permute.xlu0 0
    %220 = vperm.xlu0 %219, %v129
    %v221 = vpop.permute.xlu0 %220
    %222 = vset.pattern.permute.xlu0 0
    %223 = vperm.xlu0 %222, %v130
    %v224 = vpop.permute.xlu0 %223
    %225 = vset.pattern.permute.xlu0 0
    %226 = vperm.xlu0 %225, %v131
    %v227 = vpop.permute.xlu0 %226
    %228 = vset.pattern.permute.xlu0 0
    %229 = vperm.xlu0 %228, %v132
    %v230 = vpop.permute.xlu0 %229
    %231 = vset.pattern.permute.xlu0 0
    %232 = vperm.xlu0 %231, %v133
    %v233 = vpop.permute.xlu0 %232
    %234 = vset.pattern.permute.xlu0 0
    %235 = vperm.xlu0 %234, %v134
    %v236 = vpop.permute.xlu0 %235
    %237 = vset.pattern.permute.xlu0 0
    %238 = vperm.xlu0 %237, %v135
    %v239 = vpop.permute.xlu0 %238
    %240 = vset.pattern.permute.xlu0 0
    %241 = vperm.xlu0 %240, %v136
    %v242 = vpop.permute.xlu0 %241
    %243 = vset.pattern.permute.xlu0 0
    %244 = vperm.xlu0 %243, %v137
    %v245 = vpop.permute.xlu0 %244
    %246 = vset.pattern.permute.xlu0 0
    %247 = vperm.xlu0 %246, %v138
    %v248 = vpop.permute.xlu0 %247
    %249 = vset.pattern.permute.xlu0 0
    %250 = vperm.xlu0 %249, %v139
    %v251 = vpop.permute.xlu0 %250
    %252 = vset.pattern.permute.xlu0 0
    %253 = vperm.xlu0 %252, %v141
    %v254 = vpop.permute.xlu0 %253
    %255 = vset.pattern.permute.xlu0 0
    %256 = vperm.xlu0 %255, %v143
    %v257 = vpop.permute.xlu0 %256
    %258 = vset.pattern.permute.xlu0 0
    %259 = vperm.xlu0 %258, %v145
    %v260 = vpop.permute.xlu0 %259
    %261 = vset.pattern.permute.xlu0 0
    %262 = vperm.xlu0 %261, %v147
    %v263 = vpop.permute.xlu0 %262
    %264 = vset.pattern.permute.xlu0 0
    %265 = vperm.xlu0 %264, %v149
    %v266 = vpop.permute.xlu0 %265
    %267 = vset.pattern.permute.xlu0 0
    %268 = vperm.xlu0 %267, %v151
    %v269 = vpop.permute.xlu0 %268
    %270 = vset.pattern.permute.xlu0 0
    %271 = vperm.xlu0 %270, %v153
    %v272 = vpop.permute.xlu0 %271
    %273 = vset.pattern.permute.xlu0 0
    %274 = vperm.xlu0 %273, %v155
    %v275 = vpop.permute.xlu0 %274
    %276 = vset.pattern.permute.xlu0 0
    %277 = vperm.xlu0 %276, %v157
    %v278 = vpop.permute.xlu0 %277
    %279 = vset.pattern.permute.xlu0 0
    %280 = vperm.xlu0 %279, %v159
    %v281 = vpop.permute.xlu0 %280
    %282 = vset.pattern.permute.xlu0 0
    %283 = vperm.xlu0 %282, %v161
    %v284 = vpop.permute.xlu0 %283
    %285 = vset.pattern.permute.xlu0 0
    %286 = vperm.xlu0 %285, %v163
    %v287 = vpop.permute.xlu0 %286
    %288 = vset.pattern.permute.xlu0 0
    %289 = vperm.xlu0 %288, %v165
    %v290 = vpop.permute.xlu0 %289
    %291 = vset.pattern.permute.xlu0 0
    %292 = vperm.xlu0 %291, %v167
    %v293 = vpop.permute.xlu0 %292
    %294 = vset.pattern.permute.xlu0 0
    %295 = vperm.xlu0 %294, %v169
    %v296 = vpop.permute.xlu0 %295
    %297 = vset.pattern.permute.xlu0 0
    %298 = vperm.xlu0 %297, %v171
    %v299 = vpop.permute.xlu0 %298
    %300 = vset.pattern.permute.xlu0 0
    %301 = vperm.xlu0 %300, %v173
    %v302 = vpop.permute.xlu0 %301
    %303 = vset.pattern.permute.xlu0 0
    %304 = vperm.xlu0 %303, %v175
    %v305 = vpop.permute.xlu0 %304
    %306 = vset.pattern.permute.xlu0 0
    %307 = vperm.xlu0 %306, %v177
    %v308 = vpop.permute.xlu0 %307
    %309 = vset.pattern.permute.xlu0 0
    %310 = vperm.xlu0 %309, %v179
    %v311 = vpop.permute.xlu0 %310
    %312 = vset.pattern.permute.xlu0 0
    %313 = vperm.xlu0 %312, %v181
    %v314 = vpop.permute.xlu0 %313
    %315 = vset.pattern.permute.xlu0 0
    %316 = vperm.xlu0 %315, %v183
    %v317 = vpop.permute.xlu0 %316
    %vm318 = vcmp.eq.s32.totalorder %v188, %v185
    %vm319 = vcmp.eq.s32.totalorder %v191, %v185
    %vm320 = vcmp.eq.s32.totalorder %v194, %v185
    %vm321 = vcmp.eq.s32.totalorder %v197, %v185
    %vm322 = vcmp.eq.s32.totalorder %v200, %v185
    %vm323 = vcmp.eq.s32.totalorder %v203, %v185
    %vm324 = vcmp.eq.s32.totalorder %v206, %v185
    %vm325 = vcmp.eq.s32.totalorder %v209, %v185
    %vm326 = vcmp.eq.s32.totalorder %v212, %v185
    %vm327 = vcmp.eq.s32.totalorder %v215, %v185
    %vm328 = vcmp.eq.s32.totalorder %v218, %v185
    %vm329 = vcmp.eq.s32.totalorder %v221, %v185
    %vm330 = vcmp.eq.s32.totalorder %v224, %v185
    %vm331 = vcmp.eq.s32.totalorder %v227, %v185
    %vm332 = vcmp.eq.s32.totalorder %v230, %v185
    %vm333 = vcmp.eq.s32.totalorder %v233, %v185
    %vm334 = vcmp.eq.s32.totalorder %v236, %v185
    %vm335 = vcmp.eq.s32.totalorder %v239, %v185
    %vm336 = vcmp.eq.s32.totalorder %v242, %v185
    %vm337 = vcmp.eq.s32.totalorder %v245, %v185
    %vm338 = vcmp.eq.s32.totalorder %v248, %v185
    %vm339 = vcmp.eq.s32.totalorder %v251, %v185
    %vm340 = vcmp.eq.s32.totalorder %v254, %v185
    %vm341 = vcmp.eq.s32.totalorder %v257, %v185
    %vm342 = vcmp.eq.s32.totalorder %v260, %v185
    %vm343 = vcmp.eq.s32.totalorder %v263, %v185
    %vm344 = vcmp.eq.s32.totalorder %v266, %v185
    %vm345 = vcmp.eq.s32.totalorder %v269, %v185
    %vm346 = vcmp.eq.s32.totalorder %v272, %v185
    %vm347 = vcmp.eq.s32.totalorder %v275, %v185
    %vm348 = vcmp.eq.s32.totalorder %v278, %v185
    %vm349 = vcmp.eq.s32.totalorder %v281, %v185
    %vm350 = vcmp.eq.s32.totalorder %v284, %v185
    %vm351 = vcmp.eq.s32.totalorder %v287, %v185
    %vm352 = vcmp.eq.s32.totalorder %v290, %v185
    %vm353 = vcmp.eq.s32.totalorder %v293, %v185
    %vm354 = vcmp.eq.s32.totalorder %v296, %v185
    %vm355 = vcmp.eq.s32.totalorder %v299, %v185
    %vm356 = vcmp.eq.s32.totalorder %v302, %v185
    %vm357 = vcmp.eq.s32.totalorder %v305, %v185
    %vm358 = vcmp.eq.s32.totalorder %v308, %v185
    %vm359 = vcmp.eq.s32.totalorder %v311, %v185
    %vm360 = vcmp.eq.s32.totalorder %v314, %v185
    %vm361 = vcmp.eq.s32.totalorder %v317, %v185
    %v362 = vsel %vm318, 1, 0
    %v363 = vsel %vm319, 1, 0
    %v364 = vsel %vm320, 1, 0
    %v365 = vsel %vm321, 1, 0
    %v366 = vsel %vm322, 1, 0
    %v367 = vsel %vm323, 1, 0
    %v368 = vsel %vm324, 1, 0
    %v369 = vsel %vm325, 1, 0
    %v370 = vsel %vm326, 1, 0
    %v371 = vsel %vm327, 1, 0
    %v372 = vsel %vm328, 1, 0
    %v373 = vsel %vm329, 1, 0
    %v374 = vsel %vm330, 1, 0
    %v375 = vsel %vm331, 1, 0
    %v376 = vsel %vm332, 1, 0
    %v377 = vsel %vm333, 1, 0
    %v378 = vsel %vm334, 1, 0
    %v379 = vsel %vm335, 1, 0
    %v380 = vsel %vm336, 1, 0
    %v381 = vsel %vm337, 1, 0
    %v382 = vsel %vm338, 1, 0
    %v383 = vsel %vm339, 1, 0
    %v384 = vsel %vm340, 1, 0
    %v385 = vsel %vm341, 1, 0
    %v386 = vsel %vm342, 1, 0
    %v387 = vsel %vm343, 1, 0
    %v388 = vsel %vm344, 1, 0
    %v389 = vsel %vm345, 1, 0
    %v390 = vsel %vm346, 1, 0
    %v391 = vsel %vm347, 1, 0
    %v392 = vsel %vm348, 1, 0
    %v393 = vsel %vm349, 1, 0
    %v394 = vsel %vm350, 1, 0
    %v395 = vsel %vm351, 1, 0
    %v396 = vsel %vm352, 1, 0
    %v397 = vsel %vm353, 1, 0
    %v398 = vsel %vm354, 1, 0
    %v399 = vsel %vm355, 1, 0
    %v400 = vsel %vm356, 1, 0
    %v401 = vsel %vm357, 1, 0
    %v402 = vsel %vm358, 1, 0
    %v403 = vsel %vm359, 1, 0
    %v404 = vsel %vm360, 1, 0
    %v405 = vsel %vm361, 1, 0
    %v406 = vcvt.s32.f32 %v362
    %v407 = vcvt.s32.f32 %v363
    %v408 = vcvt.s32.f32 %v364
    %v409 = vcvt.s32.f32 %v365
    %v410 = vcvt.s32.f32 %v366
    %v411 = vcvt.s32.f32 %v367
    %v412 = vcvt.s32.f32 %v368
    %v413 = vcvt.s32.f32 %v369
    %v414 = vcvt.s32.f32 %v370
    %v415 = vcvt.s32.f32 %v371
    %v416 = vcvt.s32.f32 %v372
    %v417 = vcvt.s32.f32 %v373
    %v418 = vcvt.s32.f32 %v374
    %v419 = vcvt.s32.f32 %v375
    %v420 = vcvt.s32.f32 %v376
    %v421 = vcvt.s32.f32 %v377
    %v422 = vcvt.s32.f32 %v378
    %v423 = vcvt.s32.f32 %v379
    %v424 = vcvt.s32.f32 %v380
    %v425 = vcvt.s32.f32 %v381
    %v426 = vcvt.s32.f32 %v382
    %v427 = vcvt.s32.f32 %v383
    %v428 = vcvt.s32.f32 %v384
    %v429 = vcvt.s32.f32 %v385
    %v430 = vcvt.s32.f32 %v386
    %v431 = vcvt.s32.f32 %v387
    %v432 = vcvt.s32.f32 %v388
    %v433 = vcvt.s32.f32 %v389
    %v434 = vcvt.s32.f32 %v390
    %v435 = vcvt.s32.f32 %v391
    %v436 = vcvt.s32.f32 %v392
    %v437 = vcvt.s32.f32 %v393
    %v438 = vcvt.s32.f32 %v394
    %v439 = vcvt.s32.f32 %v395
    %v440 = vcvt.s32.f32 %v396
    %v441 = vcvt.s32.f32 %v397
    %v442 = vcvt.s32.f32 %v398
    %v443 = vcvt.s32.f32 %v399
    %v444 = vcvt.s32.f32 %v400
    %v445 = vcvt.s32.f32 %v401
    %v446 = vcvt.s32.f32 %v402
    %v447 = vcvt.s32.f32 %v403
    %v448 = vcvt.s32.f32 %v404
    %v449 = vcvt.s32.f32 %v405
    %450 = vmatprep.subr.mxu0 %v87
    %451 = vmatpush1.msra.mxu0 %v86
    %452 = vmatprep.subr.mxu0 %v89
    %453 = vmatpush1.msra.mxu0 %v88
    %454 = vmatprep.subr.mxu0 %v91
    %455 = vmatpush1.msra.mxu0 %v90
    %456 = vmatprep.subr.mxu0 %v93
    %457 = vmatpush1.msra.mxu0 %v92
    %458 = vmatprep.subr.mxu0 %v95
    %459 = vmatpush1.msra.mxu0 %v94
    %460 = vmatprep.subr.mxu0 %v97
    %461 = vmatpush1.msra.mxu0 %v96
    %462 = vmatprep.subr.mxu0 %v99
    %463 = vmatpush1.msra.mxu0 %v98
    %464 = vmatprep.subr.mxu0 %v101
    %465 = vmatpush1.msra.mxu0 %v100
    %466 = vmatprep.subr.mxu0 %v103
    %467 = vmatpush1.msra.mxu0 %v102
    %468 = vmatprep.subr.mxu0 %v105
    %469 = vmatpush1.msra.mxu0 %v104
    %470 = vmatprep.subr.mxu0 %v107
    %471 = vmatpush1.msra.mxu0 %v106
    %472 = vmatprep.subr.mxu0 %v109
    %473 = vmatpush1.msra.mxu0 %v108
    %474 = vmatprep.subr.mxu0 %v111
    %475 = vmatpush1.msra.mxu0 %v110
    %476 = vmatprep.subr.mxu0 %v113
    %477 = vmatpush1.msra.mxu0 %v112
    %478 = vmatprep.subr.mxu0 %v115
    %479 = vmatpush1.msra.mxu0 %v114
    %480 = vmatprep.subr.mxu0 %v117
    %481 = vmatpush1.msra.mxu0 %v116
    %482 = vmatprep.subr.mxu0 0.0
    %483 = vmatpush1.msra.mxu0 0.0
    %484 = vmatprep.subr.mxu0 0.0
    %485 = vmatpush1.msra.mxu0 0.0
    %486 = vmatprep.subr.mxu0 0.0
    %487 = vmatpush1.msra.mxu0 0.0
    %488 = vmatprep.subr.mxu0 0.0
    %489 = vmatpush1.msra.mxu0 0.0
    %490 = vmatprep.subr.mxu0 0.0
    %491 = vmatpush1.msra.mxu0 0.0
    %492 = vmatprep.subr.mxu0 0.0
    %493 = vmatpush1.msra.mxu0 0.0
    %494 = vmatprep.subr.mxu0 0.0
    %495 = vmatpush1.msra.mxu0 0.0
    %496 = vmatprep.subr.mxu0 0.0
    %497 = vmatpush1.msra.mxu0 0.0
    %498 = vmatprep.subr.mxu0 0.0
    %499 = vmatpush1.msra.mxu0 0.0
    %500 = vmatprep.subr.mxu0 0.0
    %501 = vmatpush1.msra.mxu0 0.0
    %502 = vmatprep.subr.mxu0 0.0
    %503 = vmatpush1.msra.mxu0 0.0
    %504 = vmatprep.subr.mxu0 0.0
    %505 = vmatpush1.msra.mxu0 0.0
    %506 = vmatprep.subr.mxu0 0.0
    %507 = vmatpush1.msra.mxu0 0.0
    %508 = vmatprep.subr.mxu0 0.0
    %509 = vmatpush1.msra.mxu0 0.0
    %510 = vmatprep.subr.mxu0 0.0
    %511 = vmatpush1.msra.mxu0 0.0
    %512 = vmatprep.subr.mxu0 0.0
    %513 = vmatpush1.msra.mxu0 0.0
    %514 = vmatprep.mubr.f32.mxu0 0.0
    %515 = vmatmul.mubr.f32.gmra.mrb[0].mxu0 %v406
    %v516 = vpop.f32.mrb[0].mxu0
    %v517 = vadd.f32 0.0, %v516
    %v518 = vpop.f32.mrb[0].mxu0
    %v519 = vadd.f32 0.0, %v518
    %520 = vmatprep.mubr.f32.mxu0 0.0
    %521 = vmatmul.mubr.f32.gmra.mrb[0].mxu0 %v407
    %v522 = vpop.f32.mrb[0].mxu0
    %v523 = vadd.f32 0.0, %v522
    %v524 = vpop.f32.mrb[0].mxu0
    %v525 = vadd.f32 0.0, %v524
    %526 = vmatprep.mubr.f32.mxu0 0.0
    %527 = vmatmul.mubr.f32.gmra.mrb[0].mxu0 %v408
    %v528 = vpop.f32.mrb[0].mxu0
    %v529 = vadd.f32 0.0, %v528
    %v530 = vpop.f32.mrb[0].mxu0
    %v531 = vadd.f32 0.0, %v530
    %532 = vmatprep.mubr.f32.mxu0 0.0
    %533 = vmatmul.mubr.f32.gmra.mrb[0].mxu0 %v409
    %v534 = vpop.f32.mrb[0].mxu0
    %v535 = vadd.f32 0.0, %v534
    %v536 = vpop.f32.mrb[0].mxu0
    %v537 = vadd.f32 0.0, %v536
    %538 = vmatprep.mubr.f32.mxu0 0.0
    %539 = vmatmul.mubr.f32.gmra.mrb[0].mxu0 %v410
    %v540 = vpop.f32.mrb[0].mxu0
    %v541 = vadd.f32 0.0, %v540
    %v542 = vpop.f32.mrb[0].mxu0
    %v543 = vadd.f32 0.0, %v542
    %544 = vmatprep.mubr.f32.mxu0 0.0
    %545 = vmatmul.mubr.f32.gmra.mrb[0].mxu0 %v411
    %v546 = vpop.f32.mrb[0].mxu0
    %v547 = vadd.f32 0.0, %v546
    %v548 = vpop.f32.mrb[0].mxu0
    %v549 = vadd.f32 0.0, %v548
    %550 = vmatprep.mubr.f32.mxu0 0.0
    %551 = vmatmul.mubr.f32.gmra.mrb[0].mxu0 %v412
    %v552 = vpop.f32.mrb[0].mxu0
    %v553 = vadd.f32 0.0, %v552
    %v554 = vpop.f32.mrb[0].mxu0
    %v555 = vadd.f32 0.0, %v554
    %556 = vmatprep.mubr.f32.mxu0 0.0
    %557 = vmatmul.mubr.f32.gmra.mrb[0].mxu0 %v413
    %v558 = vpop.f32.mrb[0].mxu0
    %v559 = vadd.f32 0.0, %v558
    %v560 = vpop.f32.mrb[0].mxu0
    %v561 = vadd.f32 0.0, %v560
    %562 = vmatprep.mubr.f32.mxu0 0.0
    %563 = vmatmul.mubr.f32.gmra.mrb[0].mxu0 %v414
    %v564 = vpop.f32.mrb[0].mxu0
    %v565 = vadd.f32 0.0, %v564
    %v566 = vpop.f32.mrb[0].mxu0
    %v567 = vadd.f32 0.0, %v566
    %568 = vmatprep.mubr.f32.mxu0 0.0
    %569 = vmatmul.mubr.f32.gmra.mrb[0].mxu0 %v415
    %v570 = vpop.f32.mrb[0].mxu0
    %v571 = vadd.f32 0.0, %v570
    %v572 = vpop.f32.mrb[0].mxu0
    %v573 = vadd.f32 0.0, %v572
    %574 = vmatprep.mubr.f32.mxu0 0.0
    %575 = vmatmul.mubr.f32.gmra.mrb[0].mxu0 %v416
    %v576 = vpop.f32.mrb[0].mxu0
    %v577 = vadd.f32 0.0, %v576
    %v578 = vpop.f32.mrb[0].mxu0
    %v579 = vadd.f32 0.0, %v578
    %580 = vmatprep.mubr.f32.mxu0 0.0
    %581 = vmatmul.mubr.f32.gmra.mrb[0].mxu0 %v417
    %v582 = vpop.f32.mrb[0].mxu0
    %v583 = vadd.f32 0.0, %v582
    %v584 = vpop.f32.mrb[0].mxu0
    %v585 = vadd.f32 0.0, %v584
    %586 = vmatprep.mubr.f32.mxu0 0.0
    %587 = vmatmul.mubr.f32.gmra.mrb[0].mxu0 %v418
    %v588 = vpop.f32.mrb[0].mxu0
    %v589 = vadd.f32 0.0, %v588
    %v590 = vpop.f32.mrb[0].mxu0
    %v591 = vadd.f32 0.0, %v590
    %592 = vmatprep.mubr.f32.mxu0 0.0
    %593 = vmatmul.mubr.f32.gmra.mrb[0].mxu0 %v419
    %v594 = vpop.f32.mrb[0].mxu0
    %v595 = vadd.f32 0.0, %v594
    %v596 = vpop.f32.mrb[0].mxu0
    %v597 = vadd.f32 0.0, %v596
    %598 = vmatprep.mubr.f32.mxu0 0.0
    %599 = vmatmul.mubr.f32.gmra.mrb[0].mxu0 %v420
    %v600 = vpop.f32.mrb[0].mxu0
    %v601 = vadd.f32 0.0, %v600
    %v602 = vpop.f32.mrb[0].mxu0
    %v603 = vadd.f32 0.0, %v602
    %604 = vmatprep.mubr.f32.mxu0 0.0
    %605 = vmatmul.mubr.f32.gmra.mrb[0].mxu0 %v421
    %v606 = vpop.f32.mrb[0].mxu0
    %v607 = vadd.f32 0.0, %v606
    %v608 = vpop.f32.mrb[0].mxu0
    %v609 = vadd.f32 0.0, %v608
    %610 = vmatprep.mubr.f32.mxu0 0.0
    %611 = vmatmul.mubr.f32.gmra.mrb[0].mxu0 %v422
    %v612 = vpop.f32.mrb[0].mxu0
    %v613 = vadd.f32 0.0, %v612
    %v614 = vpop.f32.mrb[0].mxu0
    %v615 = vadd.f32 0.0, %v614
    %616 = vmatprep.mubr.f32.mxu0 0.0
    %617 = vmatmul.mubr.f32.gmra.mrb[0].mxu0 %v423
    %v618 = vpop.f32.mrb[0].mxu0
    %v619 = vadd.f32 0.0, %v618
    %v620 = vpop.f32.mrb[0].mxu0
    %v621 = vadd.f32 0.0, %v620
    %622 = vmatprep.mubr.f32.mxu0 0.0
    %623 = vmatmul.mubr.f32.gmra.mrb[0].mxu0 %v424
    %v624 = vpop.f32.mrb[0].mxu0
    %v625 = vadd.f32 0.0, %v624
    %v626 = vpop.f32.mrb[0].mxu0
    %v627 = vadd.f32 0.0, %v626
    %628 = vmatprep.mubr.f32.mxu0 0.0
    %629 = vmatmul.mubr.f32.gmra.mrb[0].mxu0 %v425
    %v630 = vpop.f32.mrb[0].mxu0
    %v631 = vadd.f32 0.0, %v630
    %v632 = vpop.f32.mrb[0].mxu0
    %v633 = vadd.f32 0.0, %v632
    %634 = vmatprep.mubr.f32.mxu0 0.0
    %635 = vmatmul.mubr.f32.gmra.mrb[0].mxu0 %v426
    %v636 = vpop.f32.mrb[0].mxu0
    %v637 = vadd.f32 0.0, %v636
    %v638 = vpop.f32.mrb[0].mxu0
    %v639 = vadd.f32 0.0, %v638
    %640 = vmatprep.mubr.f32.mxu0 0.0
    %641 = vmatmul.mubr.f32.gmra.mrb[0].mxu0 %v427
    %v642 = vpop.f32.mrb[0].mxu0
    %v643 = vadd.f32 0.0, %v642
    %v644 = vpop.f32.mrb[0].mxu0
    %v645 = vadd.f32 0.0, %v644
    %646 = vmatprep.mubr.f32.mxu0 0.0
    %647 = vmatmul.mubr.f32.gmra.mrb[0].mxu0 %v428
    %v648 = vpop.f32.mrb[0].mxu0
    %v649 = vadd.f32 0.0, %v648
    %v650 = vpop.f32.mrb[0].mxu0
    %v651 = vadd.f32 0.0, %v650
    %652 = vmatprep.mubr.f32.mxu0 0.0
    %653 = vmatmul.mubr.f32.gmra.mrb[0].mxu0 %v429
    %v654 = vpop.f32.mrb[0].mxu0
    %v655 = vadd.f32 0.0, %v654
    %v656 = vpop.f32.mrb[0].mxu0
    %v657 = vadd.f32 0.0, %v656
    %658 = vmatprep.mubr.f32.mxu0 0.0
    %659 = vmatmul.mubr.f32.gmra.mrb[0].mxu0 %v430
    %v660 = vpop.f32.mrb[0].mxu0
    %v661 = vadd.f32 0.0, %v660
    %v662 = vpop.f32.mrb[0].mxu0
    %v663 = vadd.f32 0.0, %v662
    %664 = vmatprep.mubr.f32.mxu0 0.0
    %665 = vmatmul.mubr.f32.gmra.mrb[0].mxu0 %v431
    %v666 = vpop.f32.mrb[0].mxu0
    %v667 = vadd.f32 0.0, %v666
    %v668 = vpop.f32.mrb[0].mxu0
    %v669 = vadd.f32 0.0, %v668
    %670 = vmatprep.mubr.f32.mxu0 0.0
    %671 = vmatmul.mubr.f32.gmra.mrb[0].mxu0 %v432
    %v672 = vpop.f32.mrb[0].mxu0
    %v673 = vadd.f32 0.0, %v672
    %v674 = vpop.f32.mrb[0].mxu0
    %v675 = vadd.f32 0.0, %v674
    %676 = vmatprep.mubr.f32.mxu0 0.0
    %677 = vmatmul.mubr.f32.gmra.mrb[0].mxu0 %v433
    %v678 = vpop.f32.mrb[0].mxu0
    %v679 = vadd.f32 0.0, %v678
    %v680 = vpop.f32.mrb[0].mxu0
    %v681 = vadd.f32 0.0, %v680
    %682 = vmatprep.mubr.f32.mxu0 0.0
    %683 = vmatmul.mubr.f32.gmra.mrb[0].mxu0 %v434
    %v684 = vpop.f32.mrb[0].mxu0
    %v685 = vadd.f32 0.0, %v684
    %v686 = vpop.f32.mrb[0].mxu0
    %v687 = vadd.f32 0.0, %v686
    %688 = vmatprep.mubr.f32.mxu0 0.0
    %689 = vmatmul.mubr.f32.gmra.mrb[0].mxu0 %v435
    %v690 = vpop.f32.mrb[0].mxu0
    %v691 = vadd.f32 0.0, %v690
    %v692 = vpop.f32.mrb[0].mxu0
    %v693 = vadd.f32 0.0, %v692
    %694 = vmatprep.mubr.f32.mxu0 0.0
    %695 = vmatmul.mubr.f32.gmra.mrb[0].mxu0 %v436
    %v696 = vpop.f32.mrb[0].mxu0
    %v697 = vadd.f32 0.0, %v696
    %v698 = vpop.f32.mrb[0].mxu0
    %v699 = vadd.f32 0.0, %v698
    %700 = vmatprep.mubr.f32.mxu0 0.0
    %701 = vmatmul.mubr.f32.gmra.mrb[0].mxu0 %v437
    %v702 = vpop.f32.mrb[0].mxu0
    %v703 = vadd.f32 0.0, %v702
    %v704 = vpop.f32.mrb[0].mxu0
    %v705 = vadd.f32 0.0, %v704
    %706 = vmatprep.mubr.f32.mxu0 0.0
    %707 = vmatmul.mubr.f32.gmra.mrb[0].mxu0 %v438
    %v708 = vpop.f32.mrb[0].mxu0
    %v709 = vadd.f32 0.0, %v708
    %v710 = vpop.f32.mrb[0].mxu0
    %v711 = vadd.f32 0.0, %v710
    %712 = vmatprep.mubr.f32.mxu0 0.0
    %713 = vmatmul.mubr.f32.gmra.mrb[0].mxu0 %v439
    %v714 = vpop.f32.mrb[0].mxu0
    %v715 = vadd.f32 0.0, %v714
    %v716 = vpop.f32.mrb[0].mxu0
    %v717 = vadd.f32 0.0, %v716
    %718 = vmatprep.mubr.f32.mxu0 0.0
    %719 = vmatmul.mubr.f32.gmra.mrb[0].mxu0 %v440
    %v720 = vpop.f32.mrb[0].mxu0
    %v721 = vadd.f32 0.0, %v720
    %v722 = vpop.f32.mrb[0].mxu0
    %v723 = vadd.f32 0.0, %v722
    %724 = vmatprep.mubr.f32.mxu0 0.0
    %725 = vmatmul.mubr.f32.gmra.mrb[0].mxu0 %v441
    %v726 = vpop.f32.mrb[0].mxu0
    %v727 = vadd.f32 0.0, %v726
    %v728 = vpop.f32.mrb[0].mxu0
    %v729 = vadd.f32 0.0, %v728
    %730 = vmatprep.mubr.f32.mxu0 0.0
    %731 = vmatmul.mubr.f32.gmra.mrb[0].mxu0 %v442
    %v732 = vpop.f32.mrb[0].mxu0
    %v733 = vadd.f32 0.0, %v732
    %v734 = vpop.f32.mrb[0].mxu0
    %v735 = vadd.f32 0.0, %v734
    %736 = vmatprep.mubr.f32.mxu0 0.0
    %737 = vmatmul.mubr.f32.gmra.mrb[0].mxu0 %v443
    %v738 = vpop.f32.mrb[0].mxu0
    %v739 = vadd.f32 0.0, %v738
    %v740 = vpop.f32.mrb[0].mxu0
    %v741 = vadd.f32 0.0, %v740
    %742 = vmatprep.mubr.f32.mxu0 0.0
    %743 = vmatmul.mubr.f32.gmra.mrb[0].mxu0 %v444
    %v744 = vpop.f32.mrb[0].mxu0
    %v745 = vadd.f32 0.0, %v744
    %v746 = vpop.f32.mrb[0].mxu0
    %v747 = vadd.f32 0.0, %v746
    %748 = vmatprep.mubr.f32.mxu0 0.0
    %749 = vmatmul.mubr.f32.gmra.mrb[0].mxu0 %v445
    %v750 = vpop.f32.mrb[0].mxu0
    %v751 = vadd.f32 0.0, %v750
    %v752 = vpop.f32.mrb[0].mxu0
    %v753 = vadd.f32 0.0, %v752
    %754 = vmatprep.mubr.f32.mxu0 0.0
    %755 = vmatmul.mubr.f32.gmra.mrb[0].mxu0 %v446
    %v756 = vpop.f32.mrb[0].mxu0
    %v757 = vadd.f32 0.0, %v756
    %v758 = vpop.f32.mrb[0].mxu0
    %v759 = vadd.f32 0.0, %v758
    %760 = vmatprep.mubr.f32.mxu0 0.0
    %761 = vmatmul.mubr.f32.gmra.mrb[0].mxu0 %v447
    %v762 = vpop.f32.mrb[0].mxu0
    %v763 = vadd.f32 0.0, %v762
    %v764 = vpop.f32.mrb[0].mxu0
    %v765 = vadd.f32 0.0, %v764
    %766 = vmatprep.mubr.f32.mxu0 0.0
    %767 = vmatmul.mubr.f32.gmra.mrb[0].mxu0 %v448
    %v768 = vpop.f32.mrb[0].mxu0
    %v769 = vadd.f32 0.0, %v768
    %v770 = vpop.f32.mrb[0].mxu0
    %v771 = vadd.f32 0.0, %v770
    %772 = vmatprep.mubr.f32.mxu0 0.0
    %773 = vmatmul.mubr.f32.gmra.mrb[0].mxu0 %v449
    %v774 = vpop.f32.mrb[0].mxu0
    %v775 = vadd.f32 0.0, %v774
    %v776 = vpop.f32.mrb[0].mxu0
    %v777 = vadd.f32 0.0, %v776
    %778 = vdwg.mxu0
    %v779 = vmul.f32 %v517, %v649
    %v780 = vmul.f32 %v523, %v655
    %v781 = vmul.f32 %v529, %v661
    %v782 = vmul.f32 %v535, %v667
    %v783 = vmul.f32 %v541, %v673
    %v784 = vmul.f32 %v547, %v679
    %v785 = vmul.f32 %v553, %v685
    %v786 = vmul.f32 %v559, %v691
    %v787 = vmul.f32 %v565, %v697
    %v788 = vmul.f32 %v571, %v703
    %v789 = vmul.f32 %v577, %v709
    %v790 = vmul.f32 %v583, %v715
    %v791 = vmul.f32 %v589, %v721
    %v792 = vmul.f32 %v595, %v727
    %v793 = vmul.f32 %v601, %v733
    %v794 = vmul.f32 %v607, %v739
    %v795 = vmul.f32 %v613, %v745
    %v796 = vmul.f32 %v619, %v751
    %v797 = vmul.f32 %v625, %v757
    %v798 = vmul.f32 %v631, %v763
    %v799 = vmul.f32 %v637, %v769
    %v800 = vmul.f32 %v643, %v775
    %801 = vadd.xlane.f32.xlu0 %v779
    %v802 = vpop.xlane.xlu0 %801
    %803 = vadd.xlane.f32.xlu0 %v780
    %v804 = vpop.xlane.xlu0 %803
    %805 = vadd.xlane.f32.xlu0 %v781
    %v806 = vpop.xlane.xlu0 %805
    %807 = vadd.xlane.f32.xlu0 %v782
    %v808 = vpop.xlane.xlu0 %807
    %809 = vadd.xlane.f32.xlu0 %v783
    %v810 = vpop.xlane.xlu0 %809
    %811 = vadd.xlane.f32.xlu0 %v784
    %v812 = vpop.xlane.xlu0 %811
    %813 = vadd.xlane.f32.xlu0 %v785
    %v814 = vpop.xlane.xlu0 %813
    %815 = vadd.xlane.f32.xlu0 %v786
    %v816 = vpop.xlane.xlu0 %815
    %817 = vadd.xlane.f32.xlu0 %v787
    %v818 = vpop.xlane.xlu0 %817
    %819 = vadd.xlane.f32.xlu0 %v788
    %v820 = vpop.xlane.xlu0 %819
    %821 = vadd.xlane.f32.xlu0 %v789
    %v822 = vpop.xlane.xlu0 %821
    %823 = vadd.xlane.f32.xlu0 %v790
    %v824 = vpop.xlane.xlu0 %823
    %825 = vadd.xlane.f32.xlu0 %v791
    %v826 = vpop.xlane.xlu0 %825
    %827 = vadd.xlane.f32.xlu0 %v792
    %v828 = vpop.xlane.xlu0 %827
    %829 = vadd.xlane.f32.xlu0 %v793
    %v830 = vpop.xlane.xlu0 %829
    %831 = vadd.xlane.f32.xlu0 %v794
    %v832 = vpop.xlane.xlu0 %831
    %833 = vadd.xlane.f32.xlu0 %v795
    %v834 = vpop.xlane.xlu0 %833
    %835 = vadd.xlane.f32.xlu0 %v796
    %v836 = vpop.xlane.xlu0 %835
    %837 = vadd.xlane.f32.xlu0 %v797
    %v838 = vpop.xlane.xlu0 %837
    %839 = vadd.xlane.f32.xlu0 %v798
    %v840 = vpop.xlane.xlu0 %839
    %841 = vadd.xlane.f32.xlu0 %v799
    %v842 = vpop.xlane.xlu0 %841
    %843 = vadd.xlane.f32.xlu0 %v800
    %v844 = vpop.xlane.xlu0 %843
    %v845 = vmul.f32 %v519, %v651
    %v846 = vmul.f32 %v525, %v657
    %v847 = vmul.f32 %v531, %v663
    %v848 = vmul.f32 %v537, %v669
    %v849 = vmul.f32 %v543, %v675
    %v850 = vmul.f32 %v549, %v681
    %v851 = vmul.f32 %v555, %v687
    %v852 = vmul.f32 %v561, %v693
    %v853 = vmul.f32 %v567, %v699
    %v854 = vmul.f32 %v573, %v705
    %v855 = vmul.f32 %v579, %v711
    %v856 = vmul.f32 %v585, %v717
    %v857 = vmul.f32 %v591, %v723
    %v858 = vmul.f32 %v597, %v729
    %v859 = vmul.f32 %v603, %v735
    %v860 = vmul.f32 %v609, %v741
    %v861 = vmul.f32 %v615, %v747
    %v862 = vmul.f32 %v621, %v753
    %v863 = vmul.f32 %v627, %v759
    %v864 = vmul.f32 %v633, %v765
    %v865 = vmul.f32 %v639, %v771
    %v866 = vmul.f32 %v645, %v777
    %v867 = vmax.f32 %v845, 1e-16
    %v868 = vmax.f32 %v846, 1e-16
    %v869 = vmax.f32 %v847, 1e-16
    %v870 = vmax.f32 %v848, 1e-16
    %v871 = vmax.f32 %v849, 1e-16
    %v872 = vmax.f32 %v850, 1e-16
    %v873 = vmax.f32 %v851, 1e-16
    %v874 = vmax.f32 %v852, 1e-16
    %v875 = vmax.f32 %v853, 1e-16
    %v876 = vmax.f32 %v854, 1e-16
    %v877 = vmax.f32 %v855, 1e-16
    %v878 = vmax.f32 %v856, 1e-16
    %v879 = vmax.f32 %v857, 1e-16
    %v880 = vmax.f32 %v858, 1e-16
    %v881 = vmax.f32 %v859, 1e-16
    %v882 = vmax.f32 %v860, 1e-16
    %v883 = vmax.f32 %v861, 1e-16
    %v884 = vmax.f32 %v862, 1e-16
    %v885 = vmax.f32 %v863, 1e-16
    %v886 = vmax.f32 %v864, 1e-16
    %v887 = vmax.f32 %v865, 1e-16
    %v888 = vmax.f32 %v866, 1e-16
    %v889 = vrsqrt.pop %v867
    %v890 = vrsqrt.pop %v868
    %v891 = vrsqrt.pop %v869
    %v892 = vrsqrt.pop %v870
    %v893 = vrsqrt.pop %v871
    %v894 = vrsqrt.pop %v872
    %v895 = vrsqrt.pop %v873
    %v896 = vrsqrt.pop %v874
    %v897 = vrsqrt.pop %v875
    %v898 = vrsqrt.pop %v876
    %v899 = vrsqrt.pop %v877
    %v900 = vrsqrt.pop %v878
    %v901 = vrsqrt.pop %v879
    %v902 = vrsqrt.pop %v880
    %v903 = vrsqrt.pop %v881
    %v904 = vrsqrt.pop %v882
    %v905 = vrsqrt.pop %v883
    %v906 = vrsqrt.pop %v884
    %v907 = vrsqrt.pop %v885
    %v908 = vrsqrt.pop %v886
    %v909 = vrsqrt.pop %v887
    %v910 = vrsqrt.pop %v888
    %v911 = vmul.f32 %v802, %v889
    %v912 = vmul.f32 %v804, %v890
    %v913 = vmul.f32 %v806, %v891
    %v914 = vmul.f32 %v808, %v892
    %v915 = vmul.f32 %v810, %v893
    %v916 = vmul.f32 %v812, %v894
    %v917 = vmul.f32 %v814, %v895
    %v918 = vmul.f32 %v816, %v896
    %v919 = vmul.f32 %v818, %v897
    %v920 = vmul.f32 %v820, %v898
    %v921 = vmul.f32 %v822, %v899
    %v922 = vmul.f32 %v824, %v900
    %v923 = vmul.f32 %v826, %v901
    %v924 = vmul.f32 %v828, %v902
    %v925 = vmul.f32 %v830, %v903
    %v926 = vmul.f32 %v832, %v904
    %v927 = vmul.f32 %v834, %v905
    %v928 = vmul.f32 %v836, %v906
    %v929 = vmul.f32 %v838, %v907
    %v930 = vmul.f32 %v840, %v908
    %v931 = vmul.f32 %v842, %v909
    %v932 = vmul.f32 %v844, %v910
    %v933 = vsub.f32 1.0, %v911
    %v934 = vsub.f32 1.0, %v912
    %v935 = vsub.f32 1.0, %v913
    %v936 = vsub.f32 1.0, %v914
    %v937 = vsub.f32 1.0, %v915
    %v938 = vsub.f32 1.0, %v916
    %v939 = vsub.f32 1.0, %v917
    %v940 = vsub.f32 1.0, %v918
    %v941 = vsub.f32 1.0, %v919
    %v942 = vsub.f32 1.0, %v920
    %v943 = vsub.f32 1.0, %v921
    %v944 = vsub.f32 1.0, %v922
    %v945 = vsub.f32 1.0, %v923
    %v946 = vsub.f32 1.0, %v924
    %v947 = vsub.f32 1.0, %v925
    %v948 = vsub.f32 1.0, %v926
    %v949 = vsub.f32 1.0, %v927
    %v950 = vsub.f32 1.0, %v928
    %v951 = vsub.f32 1.0, %v929
    %v952 = vsub.f32 1.0, %v930
    %v953 = vsub.f32 1.0, %v931
    %v954 = vsub.f32 1.0, %v932
    %v955 = vld [vmem:[#allocation2] sm:$0xff]
    %v956 = vld [vmem:[#allocation2 + $0x8] sm:$0xff]
    %v957 = vld [vmem:[#allocation2 + $0x10] sm:$0xff]
    %v958 = vld [vmem:[#allocation2 + $0x18] sm:$0xff]
    %v959 = vld [vmem:[#allocation2 + $0x20] sm:$0xff]
    %v960 = vld [vmem:[#allocation2 + $0x28] sm:$0xff]
    %v961 = vld [vmem:[#allocation2 + $0x30] sm:$0xff]
    %v962 = vld [vmem:[#allocation2 + $0x38] sm:$0xff]
    %v963 = vld [vmem:[#allocation2 + $0x40] sm:$0xff]
    %v964 = vld [vmem:[#allocation2 + $0x48] sm:$0xff]
    %v965 = vld [vmem:[#allocation2 + $0x50] sm:$0xff]
    %v966 = vld [vmem:[#allocation2 + $0x58] sm:$0xff]
    %v967 = vld [vmem:[#allocation2 + $0x60] sm:$0xff]
    %v968 = vld [vmem:[#allocation2 + $0x68] sm:$0xff]
    %v969 = vld [vmem:[#allocation2 + $0x70] sm:$0xff]
    %v970 = vld [vmem:[#allocation2 + $0x78] sm:$0xff]
    %v971 = vld [vmem:[#allocation2 + $0x80] sm:$0xff]
    %v972 = vld [vmem:[#allocation2 + $0x88] sm:$0xff]
    %v973 = vld [vmem:[#allocation2 + $0x90] sm:$0xff]
    %v974 = vld [vmem:[#allocation2 + $0x98] sm:$0xff]
    %v975 = vld [vmem:[#allocation2 + $0xa0] sm:$0xff]
    %v976 = vld [vmem:[#allocation2 + $0xa8] sm:$0xff]
    %v977 = vld [vmem:[%s56] sm:$0xff]
    %v978 = vld [vmem:[%s56 + $0x8] sm:$0xff]
    %v979 = vld [vmem:[%s56 + $0x10] sm:$0xff]
    %v980 = vld [vmem:[%s56 + $0x18] sm:$0xff]
    %v981 = vld [vmem:[%s56 + $0x20] sm:$0xff]
    %v982 = vld [vmem:[%s56 + $0x28] sm:$0xff]
    %v983 = vld [vmem:[%s56 + $0x30] sm:$0xff]
    %v984 = vld [vmem:[%s56 + $0x38] sm:$0xff]
    %v985 = vld [vmem:[%s56 + $0x40] sm:$0xff]
    %v986 = vld [vmem:[%s56 + $0x48] sm:$0xff]
    %v987 = vld [vmem:[%s56 + $0x50] sm:$0xff]
    %v988 = vld [vmem:[%s56 + $0x58] sm:$0xff]
    %v989 = vld [vmem:[%s56 + $0x60] sm:$0xff]
    %v990 = vld [vmem:[%s56 + $0x68] sm:$0xff]
    %v991 = vld [vmem:[%s56 + $0x70] sm:$0xff]
    %v992 = vld [vmem:[%s56 + $0x78] sm:$0xff]
    %v993 = vld [vmem:[%s56 + $0x80] sm:$0xff]
    %v994 = vld [vmem:[%s56 + $0x88] sm:$0xff]
    %v995 = vld [vmem:[%s56 + $0x90] sm:$0xff]
    %v996 = vld [vmem:[%s56 + $0x98] sm:$0xff]
    %v997 = vld [vmem:[%s56 + $0xa0] sm:$0xff]
    %v998 = vld [vmem:[%s56 + $0xa8] sm:$0xff]
    %v999 = vsub.f32 1.0, %v933
    %v1000 = vsub.f32 1.0, %v934
    %v1001 = vsub.f32 1.0, %v935
    %v1002 = vsub.f32 1.0, %v936
    %v1003 = vsub.f32 1.0, %v937
    %v1004 = vsub.f32 1.0, %v938
    %v1005 = vsub.f32 1.0, %v939
    %v1006 = vsub.f32 1.0, %v940
    %v1007 = vsub.f32 1.0, %v941
    %v1008 = vsub.f32 1.0, %v942
    %v1009 = vsub.f32 1.0, %v943
    %v1010 = vsub.f32 1.0, %v944
    %v1011 = vsub.f32 1.0, %v945
    %v1012 = vsub.f32 1.0, %v946
    %v1013 = vsub.f32 1.0, %v947
    %v1014 = vsub.f32 1.0, %v948
    %v1015 = vsub.f32 1.0, %v949
    %v1016 = vsub.f32 1.0, %v950
    %v1017 = vsub.f32 1.0, %v951
    %v1018 = vsub.f32 1.0, %v952
    %v1019 = vsub.f32 1.0, %v953
    %v1020 = vsub.f32 1.0, %v954
    %v1021 = vmax.f32 %v999, 0.0
    %v1022 = vmax.f32 %v1000, 0.0
    %v1023 = vmax.f32 %v1001, 0.0
    %v1024 = vmax.f32 %v1002, 0.0
    %v1025 = vmax.f32 %v1003, 0.0
    %v1026 = vmax.f32 %v1004, 0.0
    %v1027 = vmax.f32 %v1005, 0.0
    %v1028 = vmax.f32 %v1006, 0.0
    %v1029 = vmax.f32 %v1007, 0.0
    %v1030 = vmax.f32 %v1008, 0.0
    %v1031 = vmax.f32 %v1009, 0.0
    %v1032 = vmax.f32 %v1010, 0.0
    %v1033 = vmax.f32 %v1011, 0.0
    %v1034 = vmax.f32 %v1012, 0.0
    %v1035 = vmax.f32 %v1013, 0.0
    %v1036 = vmax.f32 %v1014, 0.0
    %v1037 = vmax.f32 %v1015, 0.0
    %v1038 = vmax.f32 %v1016, 0.0
    %v1039 = vmax.f32 %v1017, 0.0
    %v1040 = vmax.f32 %v1018, 0.0
    %v1041 = vmax.f32 %v1019, 0.0
    %v1042 = vmax.f32 %v1020, 0.0
    %v1043 = vsub.f32 %v1021, %v933
    %v1044 = vsub.f32 %v1022, %v934
    %v1045 = vsub.f32 %v1023, %v935
    %v1046 = vsub.f32 %v1024, %v936
    %v1047 = vsub.f32 %v1025, %v937
    %v1048 = vsub.f32 %v1026, %v938
    %v1049 = vsub.f32 %v1027, %v939
    %v1050 = vsub.f32 %v1028, %v940
    %v1051 = vsub.f32 %v1029, %v941
    %v1052 = vsub.f32 %v1030, %v942
    %v1053 = vsub.f32 %v1031, %v943
    %v1054 = vsub.f32 %v1032, %v944
    %v1055 = vsub.f32 %v1033, %v945
    %v1056 = vsub.f32 %v1034, %v946
    %v1057 = vsub.f32 %v1035, %v947
    %v1058 = vsub.f32 %v1036, %v948
    %v1059 = vsub.f32 %v1037, %v949
    %v1060 = vsub.f32 %v1038, %v950
    %v1061 = vsub.f32 %v1039, %v951
    %v1062 = vsub.f32 %v1040, %v952
    %v1063 = vsub.f32 %v1041, %v953
    %v1064 = vsub.f32 %v1042, %v954
    %1087 = vrot.lane.b32.xlu0 %v1043, 1
    %v1088 = vpop.permute.xlu0 %1087
    %1089 = vrot.lane.b32.xlu0 %v1044, 1
    %v1090 = vpop.permute.xlu0 %1089
    %1091 = vrot.lane.b32.xlu0 %v1045, 1
    %v1092 = vpop.permute.xlu0 %1091
    %1093 = vrot.lane.b32.xlu0 %v1046, 1
    %v1094 = vpop.permute.xlu0 %1093
    %1095 = vrot.lane.b32.xlu0 %v1047, 1
    %v1096 = vpop.permute.xlu0 %1095
    %1097 = vrot.lane.b32.xlu0 %v1048, 1
    %v1098 = vpop.permute.xlu0 %1097
    %1099 = vrot.lane.b32.xlu0 %v1049, 1
    %v1100 = vpop.permute.xlu0 %1099
    %1101 = vrot.lane.b32.xlu0 %v1050, 1
    %v1102 = vpop.permute.xlu0 %1101
    %1103 = vrot.lane.b32.xlu0 %v1051, 1
    %v1104 = vpop.permute.xlu0 %1103
    %1105 = vrot.lane.b32.xlu0 %v1052, 1
    %v1106 = vpop.permute.xlu0 %1105
    %1107 = vrot.lane.b32.xlu0 %v1053, 1
    %v1108 = vpop.permute.xlu0 %1107
    %1109 = vrot.lane.b32.xlu0 %v1054, 1
    %v1110 = vpop.permute.xlu0 %1109
    %1111 = vrot.lane.b32.xlu0 %v1055, 1
    %v1112 = vpop.permute.xlu0 %1111
    %1113 = vrot.lane.b32.xlu0 %v1056, 1
    %v1114 = vpop.permute.xlu0 %1113
    %1115 = vrot.lane.b32.xlu0 %v1057, 1
    %v1116 = vpop.permute.xlu0 %1115
    %1117 = vrot.lane.b32.xlu0 %v1058, 1
    %v1118 = vpop.permute.xlu0 %1117
    %1119 = vrot.lane.b32.xlu0 %v1059, 1
    %v1120 = vpop.permute.xlu0 %1119
    %1121 = vrot.lane.b32.xlu0 %v1060, 1
    %v1122 = vpop.permute.xlu0 %1121
    %1123 = vrot.lane.b32.xlu0 %v1061, 1
    %v1124 = vpop.permute.xlu0 %1123
    %1125 = vrot.lane.b32.xlu0 %v1062, 1
    %v1126 = vpop.permute.xlu0 %1125
    %1127 = vrot.lane.b32.xlu0 %v1063, 1
    %v1128 = vpop.permute.xlu0 %1127
    %1129 = vrot.lane.b32.xlu0 %v1064, 1
    %v1130 = vpop.permute.xlu0 %1129
    %v1153 = vmul.f32 %v977, %v1088
    %v1154 = vmul.f32 %v978, %v1090
    %v1155 = vmul.f32 %v979, %v1092
    %v1156 = vmul.f32 %v980, %v1094
    %v1157 = vmul.f32 %v981, %v1096
    %v1158 = vmul.f32 %v982, %v1098
    %v1159 = vmul.f32 %v983, %v1100
    %v1160 = vmul.f32 %v984, %v1102
    %v1161 = vmul.f32 %v985, %v1104
    %v1162 = vmul.f32 %v986, %v1106
    %v1163 = vmul.f32 %v987, %v1108
    %v1164 = vmul.f32 %v988, %v1110
    %v1165 = vmul.f32 %v989, %v1112
    %v1166 = vmul.f32 %v990, %v1114
    %v1167 = vmul.f32 %v991, %v1116
    %v1168 = vmul.f32 %v992, %v1118
    %v1169 = vmul.f32 %v993, %v1120
    %v1170 = vmul.f32 %v994, %v1122
    %v1171 = vmul.f32 %v995, %v1124
    %v1172 = vmul.f32 %v996, %v1126
    %v1173 = vmul.f32 %v997, %v1128
    %v1174 = vmul.f32 %v998, %v1130
    %1197 = vrot.lane.b32.xlu0 %v1153, 127
    %v1198 = vpop.permute.xlu0 %1197
    %1199 = vrot.lane.b32.xlu0 %v1154, 127
    %v1200 = vpop.permute.xlu0 %1199
    %1201 = vrot.lane.b32.xlu0 %v1155, 127
    %v1202 = vpop.permute.xlu0 %1201
    %1203 = vrot.lane.b32.xlu0 %v1156, 127
    %v1204 = vpop.permute.xlu0 %1203
    %1205 = vrot.lane.b32.xlu0 %v1157, 127
    %v1206 = vpop.permute.xlu0 %1205
    %1207 = vrot.lane.b32.xlu0 %v1158, 127
    %v1208 = vpop.permute.xlu0 %1207
    %1209 = vrot.lane.b32.xlu0 %v1159, 127
    %v1210 = vpop.permute.xlu0 %1209
    %1211 = vrot.lane.b32.xlu0 %v1160, 127
    %v1212 = vpop.permute.xlu0 %1211
    %1213 = vrot.lane.b32.xlu0 %v1161, 127
    %v1214 = vpop.permute.xlu0 %1213
    %1215 = vrot.lane.b32.xlu0 %v1162, 127
    %v1216 = vpop.permute.xlu0 %1215
    %1217 = vrot.lane.b32.xlu0 %v1163, 127
    %v1218 = vpop.permute.xlu0 %1217
    %1219 = vrot.lane.b32.xlu0 %v1164, 127
    %v1220 = vpop.permute.xlu0 %1219
    %1221 = vrot.lane.b32.xlu0 %v1165, 127
    %v1222 = vpop.permute.xlu0 %1221
    %1223 = vrot.lane.b32.xlu0 %v1166, 127
    %v1224 = vpop.permute.xlu0 %1223
    %1225 = vrot.lane.b32.xlu0 %v1167, 127
    %v1226 = vpop.permute.xlu0 %1225
    %1227 = vrot.lane.b32.xlu0 %v1168, 127
    %v1228 = vpop.permute.xlu0 %1227
    %1229 = vrot.lane.b32.xlu0 %v1169, 127
    %v1230 = vpop.permute.xlu0 %1229
    %1231 = vrot.lane.b32.xlu0 %v1170, 127
    %v1232 = vpop.permute.xlu0 %1231
    %1233 = vrot.lane.b32.xlu0 %v1171, 127
    %v1234 = vpop.permute.xlu0 %1233
    %1235 = vrot.lane.b32.xlu0 %v1172, 127
    %v1236 = vpop.permute.xlu0 %1235
    %1237 = vrot.lane.b32.xlu0 %v1173, 127
    %v1238 = vpop.permute.xlu0 %1237
    %1239 = vrot.lane.b32.xlu0 %v1174, 127
    %v1240 = vpop.permute.xlu0 %1239
    %v1263 = vadd.f32 %v933, %v1198
    %v1264 = vadd.f32 %v934, %v1200
    %v1265 = vadd.f32 %v935, %v1202
    %v1266 = vadd.f32 %v936, %v1204
    %v1267 = vadd.f32 %v937, %v1206
    %v1268 = vadd.f32 %v938, %v1208
    %v1269 = vadd.f32 %v939, %v1210
    %v1270 = vadd.f32 %v940, %v1212
    %v1271 = vadd.f32 %v941, %v1214
    %v1272 = vadd.f32 %v942, %v1216
    %v1273 = vadd.f32 %v943, %v1218
    %v1274 = vadd.f32 %v944, %v1220
    %v1275 = vadd.f32 %v945, %v1222
    %v1276 = vadd.f32 %v946, %v1224
    %v1277 = vadd.f32 %v947, %v1226
    %v1278 = vadd.f32 %v948, %v1228
    %v1279 = vadd.f32 %v949, %v1230
    %v1280 = vadd.f32 %v950, %v1232
    %v1281 = vadd.f32 %v951, %v1234
    %v1282 = vadd.f32 %v952, %v1236
    %v1283 = vadd.f32 %v953, %v1238
    %v1284 = vadd.f32 %v954, %v1240
    %v1285 = vmul.f32 %v977, %v1263
    %v1286 = vmul.f32 %v978, %v1264
    %v1287 = vmul.f32 %v979, %v1265
    %v1288 = vmul.f32 %v980, %v1266
    %v1289 = vmul.f32 %v981, %v1267
    %v1290 = vmul.f32 %v982, %v1268
    %v1291 = vmul.f32 %v983, %v1269
    %v1292 = vmul.f32 %v984, %v1270
    %v1293 = vmul.f32 %v985, %v1271
    %v1294 = vmul.f32 %v986, %v1272
    %v1295 = vmul.f32 %v987, %v1273
    %v1296 = vmul.f32 %v988, %v1274
    %v1297 = vmul.f32 %v989, %v1275
    %v1298 = vmul.f32 %v990, %v1276
    %v1299 = vmul.f32 %v991, %v1277
    %v1300 = vmul.f32 %v992, %v1278
    %v1301 = vmul.f32 %v993, %v1279
    %v1302 = vmul.f32 %v994, %v1280
    %v1303 = vmul.f32 %v995, %v1281
    %v1304 = vmul.f32 %v996, %v1282
    %v1305 = vmul.f32 %v997, %v1283
    %v1306 = vmul.f32 %v998, %v1284
    %v1307 = vadd.f32 %v955, %v1285
    %v1308 = vadd.f32 %v956, %v1286
    %v1309 = vadd.f32 %v957, %v1287
    %v1310 = vadd.f32 %v958, %v1288
    %v1311 = vadd.f32 %v959, %v1289
    %v1312 = vadd.f32 %v960, %v1290
    %v1313 = vadd.f32 %v961, %v1291
    %v1314 = vadd.f32 %v962, %v1292
    %v1315 = vadd.f32 %v963, %v1293
    %v1316 = vadd.f32 %v964, %v1294
    %v1317 = vadd.f32 %v965, %v1295
    %v1318 = vadd.f32 %v966, %v1296
    %v1319 = vadd.f32 %v967, %v1297
    %v1320 = vadd.f32 %v968, %v1298
    %v1321 = vadd.f32 %v969, %v1299
    %v1322 = vadd.f32 %v970, %v1300
    %v1323 = vadd.f32 %v971, %v1301
    %v1324 = vadd.f32 %v972, %v1302
    %v1325 = vadd.f32 %v973, %v1303
    %v1326 = vadd.f32 %v974, %v1304
    %v1327 = vadd.f32 %v975, %v1305
    %v1328 = vadd.f32 %v976, %v1306
    %vm1329 = vcmask 7168
    %1330 = vst.msk [vmem:[#allocation2] sm:$0xff] %vm1329, %v1307
    %1331 = vst.msk [vmem:[#allocation2 + $0x8] sm:$0xff] %vm1329, %v1308
    %1332 = vst.msk [vmem:[#allocation2 + $0x10] sm:$0xff] %vm1329, %v1309
    %1333 = vst.msk [vmem:[#allocation2 + $0x18] sm:$0xff] %vm1329, %v1310
    %1334 = vst.msk [vmem:[#allocation2 + $0x20] sm:$0xff] %vm1329, %v1311
    %1335 = vst.msk [vmem:[#allocation2 + $0x28] sm:$0xff] %vm1329, %v1312
    %1336 = vst.msk [vmem:[#allocation2 + $0x30] sm:$0xff] %vm1329, %v1313
    %1337 = vst.msk [vmem:[#allocation2 + $0x38] sm:$0xff] %vm1329, %v1314
    %1338 = vst.msk [vmem:[#allocation2 + $0x40] sm:$0xff] %vm1329, %v1315
    %1339 = vst.msk [vmem:[#allocation2 + $0x48] sm:$0xff] %vm1329, %v1316
    %1340 = vst.msk [vmem:[#allocation2 + $0x50] sm:$0xff] %vm1329, %v1317
    %1341 = vst.msk [vmem:[#allocation2 + $0x58] sm:$0xff] %vm1329, %v1318
    %1342 = vst.msk [vmem:[#allocation2 + $0x60] sm:$0xff] %vm1329, %v1319
    %1343 = vst.msk [vmem:[#allocation2 + $0x68] sm:$0xff] %vm1329, %v1320
    %1344 = vst.msk [vmem:[#allocation2 + $0x70] sm:$0xff] %vm1329, %v1321
    %1345 = vst.msk [vmem:[#allocation2 + $0x78] sm:$0xff] %vm1329, %v1322
    %1346 = vst.msk [vmem:[#allocation2 + $0x80] sm:$0xff] %vm1329, %v1323
    %1347 = vst.msk [vmem:[#allocation2 + $0x88] sm:$0xff] %vm1329, %v1324
    %1348 = vst.msk [vmem:[#allocation2 + $0x90] sm:$0xff] %vm1329, %v1325
    %1349 = vst.msk [vmem:[#allocation2 + $0x98] sm:$0xff] %vm1329, %v1326
    %1350 = vst.msk [vmem:[#allocation2 + $0xa0] sm:$0xff] %vm1329, %v1327
    %1351 = vst.msk [vmem:[#allocation2 + $0xa8] sm:$0xff] %vm1329, %v1328
    // Predicated region
    $region18: #{tpu_custom_call.1} parent=1 // pred_check
      %p1352 = pneg %p59
    $region19: #{tpu_custom_call.1} parent=1 // pred_check_branch
      %1354 = sbr.rel (%p1352) target = $region21
    $region20: #{tpu_custom_call.1} parent=1 // pred_region
      %v1355 = vld [vmem:[#allocation2] sm:$0xff]
      %v1356 = vld [vmem:[#allocation2 + $0x8] sm:$0xff]
      %v1357 = vld [vmem:[#allocation2 + $0x10] sm:$0xff]
      %v1358 = vld [vmem:[#allocation2 + $0x18] sm:$0xff]
      %v1359 = vld [vmem:[#allocation2 + $0x20] sm:$0xff]
      %v1360 = vld [vmem:[#allocation2 + $0x28] sm:$0xff]
      %v1361 = vld [vmem:[#allocation2 + $0x30] sm:$0xff]
      %v1362 = vld [vmem:[#allocation2 + $0x38] sm:$0xff]
      %v1363 = vld [vmem:[#allocation2 + $0x40] sm:$0xff]
      %v1364 = vld [vmem:[#allocation2 + $0x48] sm:$0xff]
      %v1365 = vld [vmem:[#allocation2 + $0x50] sm:$0xff]
      %v1366 = vld [vmem:[#allocation2 + $0x58] sm:$0xff]
      %v1367 = vld [vmem:[#allocation2 + $0x60] sm:$0xff]
      %v1368 = vld [vmem:[#allocation2 + $0x68] sm:$0xff]
      %v1369 = vld [vmem:[#allocation2 + $0x70] sm:$0xff]
      %v1370 = vld [vmem:[#allocation2 + $0x78] sm:$0xff]
      %v1371 = vld [vmem:[#allocation2 + $0x80] sm:$0xff]
      %v1372 = vld [vmem:[#allocation2 + $0x88] sm:$0xff]
      %v1373 = vld [vmem:[#allocation2 + $0x90] sm:$0xff]
      %v1374 = vld [vmem:[#allocation2 + $0x98] sm:$0xff]
      %v1375 = vld [vmem:[#allocation2 + $0xa0] sm:$0xff]
      %v1376 = vld [vmem:[#allocation2 + $0xa8] sm:$0xff]
      %v1377 = vsel %vm1329, %v1355, 0.0
      %v1378 = vsel %vm1329, %v1356, 0.0
      %v1379 = vadd.f32 %v1377, %v1378
      %v1380 = vsel %vm1329, %v1357, 0.0
      %v1381 = vadd.f32 %v1379, %v1380
      %v1382 = vsel %vm1329, %v1358, 0.0
      %v1383 = vadd.f32 %v1381, %v1382
      %v1384 = vsel %vm1329, %v1359, 0.0
      %v1385 = vadd.f32 %v1383, %v1384
      %v1386 = vsel %vm1329, %v1360, 0.0
      %v1387 = vadd.f32 %v1385, %v1386
      %v1388 = vsel %vm1329, %v1361, 0.0
      %v1389 = vadd.f32 %v1387, %v1388
      %v1390 = vsel %vm1329, %v1362, 0.0
      %v1391 = vadd.f32 %v1389, %v1390
      %v1392 = vsel %vm1329, %v1363, 0.0
      %v1393 = vadd.f32 %v1391, %v1392
      %v1394 = vsel %vm1329, %v1364, 0.0
      %v1395 = vadd.f32 %v1393, %v1394
      %v1396 = vsel %vm1329, %v1365, 0.0
      %v1397 = vadd.f32 %v1395, %v1396
      %v1398 = vsel %vm1329, %v1366, 0.0
      %v1399 = vadd.f32 %v1397, %v1398
      %v1400 = vsel %vm1329, %v1367, 0.0
      %v1401 = vadd.f32 %v1399, %v1400
      %v1402 = vsel %vm1329, %v1368, 0.0
      %v1403 = vadd.f32 %v1401, %v1402
      %v1404 = vsel %vm1329, %v1369, 0.0
      %v1405 = vadd.f32 %v1403, %v1404
      %v1406 = vsel %vm1329, %v1370, 0.0
      %v1407 = vadd.f32 %v1405, %v1406
      %v1408 = vsel %vm1329, %v1371, 0.0
      %v1409 = vadd.f32 %v1407, %v1408
      %v1410 = vsel %vm1329, %v1372, 0.0
      %v1411 = vadd.f32 %v1409, %v1410
      %v1412 = vsel %vm1329, %v1373, 0.0
      %v1413 = vadd.f32 %v1411, %v1412
      %v1414 = vsel %vm1329, %v1374, 0.0
      %v1415 = vadd.f32 %v1413, %v1414
      %v1416 = vsel %vm1329, %v1375, 0.0
      %v1417 = vadd.f32 %v1415, %v1416
      %v1418 = vsel %vm1329, %v1376, 0.0
      %v1419 = vadd.f32 %v1417, %v1418
      %1420 = vadd.xlane.f32.xlu0 %v1419
      %v1421 = vpop.xlane.xlu0 %1420
      %v1422 = vrot.slane %v1421, 4
      %v1423 = vadd.f32 %v1421, %v1422
      %v1424 = vrot.slane %v1423, 2
      %v1425 = vadd.f32 %v1423, %v1424
      %v1426 = vrot.slane %v1425, 1
      %v1427 = vadd.f32 %v1425, %v1426
      %s1428 = vtos %v1427
      %v1429 = vstv %s1428
      %v1430 = vadd.f32 %v1429, 0.0
      %1431 = vst [vmem:[#allocation3] sm:$0x1] %v1430
    $region21: #{tpu_custom_call.1} parent=1 // pred_fallthru
      _
    // Predicated region
    $region22: #{tpu_custom_call.1} parent=1 // pred_check
      _
    $region23: #{tpu_custom_call.1} parent=1 // pred_check_branch
      %1433 = sbr.rel (0) target = $region25
    $region24: #{tpu_custom_call.1} parent=1 // pred_region
      %s1435 = ssub.s32 16, 16
      %1436 = vsyncadd [#allocation4], %s1435
      %s1438 = sshll.u32 [#allocation3], 4
      %s1439 = int_to_ptr.vmem [resolvable:$true] %s1438
      %1441 = dma.vmem_to_hbm [thread:$0]  %s1439, 16, %s3, [#allocation4]
    $region25: #{tpu_custom_call.1} parent=1 // pred_fallthru
      _
    // Predicated region
    $region26: #{tpu_custom_call.1} parent=1 // pred_check
      _
    $region27: #{tpu_custom_call.1} parent=1 // pred_check_branch
      %1443 = sbr.rel (0) target = $region29
    $region28: #{tpu_custom_call.1} parent=1 // pred_region
      %1444 = dma.done [#allocation4], 16
    $region29: #{tpu_custom_call.1} parent=1 // pred_fallthru
      _
    %1445 = vsyncpa [#allocation4], 1

</llo_original>
